<compile_context>
chip_gen: v7x
topology: tpu7x:2x2x1
jax: 0.10.0
libtpu: 0.0.40
codegen_flags: <defaults>
</compile_context>

<pallas_src>
import functools

import jax
import jax.numpy as jnp
from jax.experimental import pallas as pl
from jax.experimental.pallas import tpu as pltpu

FEAT_IN = 28 * 28          # 784
H1 = 512
H2 = 256
TM_MAX = 1024              # batch-tile upper bound (review: sweep 512-2048)


def _round_up(v, m):
    return ((v + m - 1) // m) * m


def _pick_act_dtype():
    """bf16 activations only on gens with a bf16 VALU (v6e / v7x)."""
    try:
        kind = jax.devices()[0].device_kind.lower()
    except Exception:
        return jnp.float32
    return jnp.bfloat16 if ("v6" in kind or "v7" in kind) else jnp.float32


def _leaky_relu(x, slope=0.2):
    # max(x, 0.2*x): 2 VALU ops/element vs 3 for where(cmp, x, 0.2*x).
    return jnp.maximum(x, jnp.asarray(slope, x.dtype) * x)


def discriminator_kernel(x_ref, w1_ref, b1_ref, w2_ref, b2_ref, w3_ref, b3_ref,
                         o_ref, *, act_dtype):
    # x:  (tm, 784) f32          w1: (784, 512) bf16   b1: (1, 512) f32
    # w2: (512, 256) bf16        b2: (1, 256) f32
    # w3: (1, 256) f32 (row form of the (256, 1) weight)     b3: (1, 1) f32
    # o:  (tm, 1) f32
    x = x_ref[...].astype(jnp.bfloat16)                       # fused input cast

    # Layer 1: Linear(784 -> 512) + LeakyReLU(0.2). bf16 MXU, f32 accumulate.
    h1 = jnp.dot(x, w1_ref[...], preferred_element_type=jnp.float32) + b1_ref[...]
    h1 = _leaky_relu(h1.astype(act_dtype)).astype(jnp.bfloat16)

    # Layer 2: Linear(512 -> 256) + LeakyReLU(0.2).
    h2 = jnp.dot(h1, w2_ref[...], preferred_element_type=jnp.float32) + b2_ref[...]
    h2 = _leaky_relu(h2)                                       # f32 (feeds VPU reduce)

    # Layer 3: Linear(256 -> 1) + Sigmoid.  VPU broadcast-multiply + XLU lane
    # reduction (a degenerate (256, 1) MXU matmul would waste an MXU pass);
    # sigmoid as EUP exp + approx reciprocal.
    logit = jnp.sum(h2 * w3_ref[...], axis=-1, keepdims=True) + b3_ref[...]
    o_ref[...] = pl.reciprocal(1.0 + jnp.exp(-logit), approx=True)


def init_params(key):
    """nn.Linear-style uniform(-1/sqrt(fan_in), +) init, stored (in, out)."""
    def linear(k, fan_in, fan_out):
        kw, kb = jax.random.split(k)
        bound = fan_in ** -0.5
        w = jax.random.uniform(kw, (fan_in, fan_out), jnp.float32, -bound, bound)
        b = jax.random.uniform(kb, (fan_out,), jnp.float32, -bound, bound)
        return w, b

    k1, k2, k3 = jax.random.split(key, 3)
    w1, b1 = linear(k1, FEAT_IN, H1)
    w2, b2 = linear(k2, H1, H2)
    w3, b3 = linear(k3, H2, 1)
    return (w1, b1, w2, b2, w3, b3)


def prepare_params(raw_params):
    """One-time host-side prep: cast matmul weights to bf16, reshape biases."""
    w1, b1, w2, b2, w3, b3 = raw_params
    return (w1.astype(jnp.bfloat16),                       # (784, 512)
            b1.reshape(1, H1).astype(jnp.float32),
            w2.astype(jnp.bfloat16),                       # (512, 256)
            b2.reshape(1, H2).astype(jnp.float32),
            w3.reshape(1, H2).astype(jnp.float32),         # (256, 1) -> (1, 256)
            b3.reshape(1, 1).astype(jnp.float32))


def discriminator_forward(img, prepared_params, *, tm_max=TM_MAX, act_dtype=None):
    """img: (B, 1, 28, 28) float32 NCHW.  Returns (B, 1) validity in (0, 1)."""
    if act_dtype is None:
        act_dtype = _pick_act_dtype()
    w1, b1, w2, b2, w3, b3 = prepared_params
    B = img.shape[0]

    # Flatten only; no batch/K padding and no host-side cast (cast is in-kernel).
    x = img.reshape(B, -1).astype(jnp.float32)                 # (B, 784)

    if B <= 8:
        tm = B                                   # block == full batch dim
    else:
        # Largest tile <= tm_max that still leaves >= 2 grid steps (v7x cores).
        tm = min(tm_max, _round_up(pl.cdiv(B, 2), 8))
    grid = (pl.cdiv(B, tm),)                     # partial last block clipped by Pallas

    kernel = functools.partial(discriminator_kernel, act_dtype=act_dtype)
    out = pl.pallas_call(
        kernel,
        out_shape=jax.ShapeDtypeStruct((B, 1), jnp.float32),
        grid_spec=pltpu.PrefetchScalarGridSpec(
            num_scalar_prefetch=0,
            grid=grid,
            in_specs=[
                pl.BlockSpec((tm, FEAT_IN), lambda i: (i, 0)),   # x: tiled over batch
                pl.BlockSpec((FEAT_IN, H1), lambda i: (0, 0)),   # w1: resident
                pl.BlockSpec((1, H1), lambda i: (0, 0)),         # b1: resident
                pl.BlockSpec((H1, H2), lambda i: (0, 0)),        # w2: resident
                pl.BlockSpec((1, H2), lambda i: (0, 0)),         # b2: resident
                pl.BlockSpec((1, H2), lambda i: (0, 0)),         # w3: resident
                pl.BlockSpec((1, 1), lambda i: (0, 0)),          # b3: resident
            ],
            out_specs=pl.BlockSpec((tm, 1), lambda i: (i, 0)),   # narrow (B, 1) output
        ),
        compiler_params=pltpu.CompilerParams(
            dimension_semantics=("parallel",),
            vmem_limit_bytes=48 * 1024 * 1024,   # big tiles fit even on v5e defaults
        ),
    )(x, w1, b1, w2, b2, w3, b3)

    return out


def reference_forward(img, prepared_params, act_dtype):
    """Pure-JAX reference matching kernel numerics (bf16 matmul inputs, f32 acc)."""
    w1, b1, w2, b2, w3, b3 = prepared_params
    x = img.reshape(img.shape[0], -1).astype(jnp.bfloat16)
    h1 = jnp.dot(x, w1, preferred_element_type=jnp.float32) + b1
    h1 = _leaky_relu(h1.astype(act_dtype)).astype(jnp.bfloat16)
    h2 = jnp.dot(h1, w2, preferred_element_type=jnp.float32) + b2
    h2 = _leaky_relu(h2)
    logit = jnp.sum(h2 * w3, axis=-1, keepdims=True) + b3
    return 1.0 / (1.0 + jnp.exp(-logit))


if __name__ == "__main__":
    key = jax.random.PRNGKey(0)
    k_param, k_img = jax.random.split(key)

    raw_params = init_params(k_param)
    params = prepare_params(raw_params)

    # Small batch, deliberately NOT tile-aligned: tm=32, 2 grid steps, and a
    # clipped partial last block (rows 50..63 discarded by Pallas).
    B = 50
    img = jax.random.normal(k_img, (B, 1, 28, 28), dtype=jnp.float32)

    act_dtype = _pick_act_dtype()
    validity = jax.block_until_ready(
        discriminator_forward(img, params, act_dtype=act_dtype))
    expected = reference_forward(img, params, act_dtype)

    assert validity.shape == (B, 1), validity.shape
    err = float(jnp.max(jnp.abs(validity - expected)))
    # bf16 matmul inputs + approx-reciprocal sigmoid => small absolute error.
    assert err < 2e-3, err
    print("KERNEL_OK")
</pallas_src>

<mosaic_0001>
module attributes {stable_mosaic.version = 11 : i64} {
  func.func @discriminator_kernel(%arg0: i32, %arg1: memref<32x784xf32, #tpu.memory_space<vmem>>, %arg2: memref<784x512xbf16, #tpu.memory_space<vmem>>, %arg3: memref<1x512xf32, #tpu.memory_space<vmem>>, %arg4: memref<512x256xbf16, #tpu.memory_space<vmem>>, %arg5: memref<1x256xf32, #tpu.memory_space<vmem>>, %arg6: memref<1x256xf32, #tpu.memory_space<vmem>>, %arg7: memref<1x1xf32, #tpu.memory_space<vmem>>, %arg8: memref<32x1xf32, #tpu.memory_space<vmem>>) attributes {dimension_semantics = [#tpu.dimension_semantics<parallel>], iteration_bounds = array<i64: 2>, scalar_prefetch = 0 : i64, scratch_operands = 0 : i64, tpu.core_type = #tpu.core_type<tc>, window_params = [{transform_indices = @transform_0, window_bounds = array<i64: 32, 784>}, {pipeline_mode = #tpu.pipeline_mode<synchronous>, transform_indices = @transform_1, window_bounds = array<i64: 784, 512>}, {pipeline_mode = #tpu.pipeline_mode<synchronous>, transform_indices = @transform_2, window_bounds = array<i64: 1, 512>}, {pipeline_mode = #tpu.pipeline_mode<synchronous>, transform_indices = @transform_3, window_bounds = array<i64: 512, 256>}, {pipeline_mode = #tpu.pipeline_mode<synchronous>, transform_indices = @transform_4, window_bounds = array<i64: 1, 256>}, {pipeline_mode = #tpu.pipeline_mode<synchronous>, transform_indices = @transform_5, window_bounds = array<i64: 1, 256>}, {pipeline_mode = #tpu.pipeline_mode<synchronous>, transform_indices = @transform_6, window_bounds = array<i64: 1, 1>}, {transform_indices = @transform_7, window_bounds = array<i64: 32, 1>}]} {
    %c0 = arith.constant 0 : index
    %c0_0 = arith.constant 0 : index
    %0 = vector.load %arg1[%c0, %c0_0] : memref<32x784xf32, #tpu.memory_space<vmem>>, vector<32x784xf32>
    %1 = arith.truncf %0 : vector<32x784xf32> to vector<32x784xbf16>
    %c0_1 = arith.constant 0 : index
    %c0_2 = arith.constant 0 : index
    %2 = vector.load %arg2[%c0_1, %c0_2] : memref<784x512xbf16, #tpu.memory_space<vmem>>, vector<784x512xbf16>
    %cst = arith.constant dense<0.000000e+00> : vector<32x512xf32>
    %3 = tpu.matmul %1, %2, %cst {dimension_numbers = #tpu.dot_dimension_numbers<[1], [0], [0], [1], [0, 0, 1, 1], [], []>} : vector<32x784xbf16>, vector<784x512xbf16>, vector<32x512xf32> -> vector<32x512xf32>
    %c0_3 = arith.constant 0 : index
    %c0_4 = arith.constant 0 : index
    %4 = vector.load %arg3[%c0_3, %c0_4] : memref<1x512xf32, #tpu.memory_space<vmem>>, vector<1x512xf32>
    %5 = vector.broadcast %4 : vector<1x512xf32> to vector<32x512xf32>
    %6 = arith.addf %3, %5 : vector<32x512xf32>
    %cst_5 = arith.constant 2.000000e-01 : f32
    %7 = vector.broadcast %cst_5 : f32 to vector<32x512xf32>
    %8 = arith.mulf %7, %6 : vector<32x512xf32>
    %9 = arith.maximumf %6, %8 : vector<32x512xf32>
    %10 = arith.truncf %9 : vector<32x512xf32> to vector<32x512xbf16>
    %c0_6 = arith.constant 0 : index
    %c0_7 = arith.constant 0 : index
    %11 = vector.load %arg4[%c0_6, %c0_7] : memref<512x256xbf16, #tpu.memory_space<vmem>>, vector<512x256xbf16>
    %cst_8 = arith.constant dense<0.000000e+00> : vector<32x256xf32>
    %12 = tpu.matmul %10, %11, %cst_8 {dimension_numbers = #tpu.dot_dimension_numbers<[1], [0], [0], [1], [0, 0, 1, 1], [], []>} : vector<32x512xbf16>, vector<512x256xbf16>, vector<32x256xf32> -> vector<32x256xf32>
    %c0_9 = arith.constant 0 : index
    %c0_10 = arith.constant 0 : index
    %13 = vector.load %arg5[%c0_9, %c0_10] : memref<1x256xf32, #tpu.memory_space<vmem>>, vector<1x256xf32>
    %14 = vector.broadcast %13 : vector<1x256xf32> to vector<32x256xf32>
    %15 = arith.addf %12, %14 : vector<32x256xf32>
    %cst_11 = arith.constant 2.000000e-01 : f32
    %16 = vector.broadcast %cst_11 : f32 to vector<32x256xf32>
    %17 = arith.mulf %16, %15 : vector<32x256xf32>
    %18 = arith.maximumf %15, %17 : vector<32x256xf32>
    %c0_12 = arith.constant 0 : index
    %c0_13 = arith.constant 0 : index
    %19 = vector.load %arg6[%c0_12, %c0_13] : memref<1x256xf32, #tpu.memory_space<vmem>>, vector<1x256xf32>
    %20 = vector.broadcast %19 : vector<1x256xf32> to vector<32x256xf32>
    %21 = arith.mulf %18, %20 : vector<32x256xf32>
    %cst_14 = arith.constant dense<0.000000e+00> : vector<32xf32>
    %22 = vector.multi_reduction <add>, %21, %cst_14 [1] : vector<32x256xf32> to vector<32xf32>
    %23 = vector.shape_cast %22 : vector<32xf32> to vector<32x1xf32>
    %c0_15 = arith.constant 0 : index
    %c0_16 = arith.constant 0 : index
    %24 = vector.load %arg7[%c0_15, %c0_16] : memref<1x1xf32, #tpu.memory_space<vmem>>, vector<1x1xf32>
    %25 = vector.broadcast %24 : vector<1x1xf32> to vector<32x1xf32>
    %26 = arith.addf %23, %25 : vector<32x1xf32>
    %cst_17 = arith.constant 0.000000e+00 : f32
    %27 = vector.broadcast %cst_17 : f32 to vector<32x1xf32>
    %28 = arith.subf %27, %26 : vector<32x1xf32>
    %29 = math.exp %28 : vector<32x1xf32>
    %cst_18 = arith.constant 1.000000e+00 : f32
    %30 = vector.broadcast %cst_18 : f32 to vector<32x1xf32>
    %31 = arith.addf %30, %29 : vector<32x1xf32>
    %32 = tpu.reciprocal %31 {approx = true} : vector<32x1xf32> -> vector<32x1xf32>
    %c0_19 = arith.constant 0 : index
    %c0_20 = arith.constant 0 : index
    %33 = vector.load %arg8[%c0_19, %c0_20] : memref<32x1xf32, #tpu.memory_space<vmem>>, vector<32x1xf32>
    tpu.vector_store %arg8[%c0_19, %c0_20], %32 {strides = array<i32>} : memref<32x1xf32, #tpu.memory_space<vmem>>, vector<32x1xf32>,
    return
  }
  func.func @transform_0(%arg0: i32) -> (i32, i32) {
    %c0_i32 = arith.constant 0 : i32
    %c0_i32_0 = arith.constant 0 : i32
    return %arg0, %c0_i32 : i32, i32
  }
  func.func @transform_1(%arg0: i32) -> (i32, i32) {
    %c0_i32 = arith.constant 0 : i32
    %c0_i32_0 = arith.constant 0 : i32
    %c0_i32_1 = arith.constant 0 : i32
    return %c0_i32, %c0_i32_0 : i32, i32
  }
  func.func @transform_2(%arg0: i32) -> (i32, i32) {
    %c0_i32 = arith.constant 0 : i32
    %c0_i32_0 = arith.constant 0 : i32
    %c0_i32_1 = arith.constant 0 : i32
    return %c0_i32, %c0_i32_0 : i32, i32
  }
  func.func @transform_3(%arg0: i32) -> (i32, i32) {
    %c0_i32 = arith.constant 0 : i32
    %c0_i32_0 = arith.constant 0 : i32
    %c0_i32_1 = arith.constant 0 : i32
    return %c0_i32, %c0_i32_0 : i32, i32
  }
  func.func @transform_4(%arg0: i32) -> (i32, i32) {
    %c0_i32 = arith.constant 0 : i32
    %c0_i32_0 = arith.constant 0 : i32
    %c0_i32_1 = arith.constant 0 : i32
    return %c0_i32, %c0_i32_0 : i32, i32
  }
  func.func @transform_5(%arg0: i32) -> (i32, i32) {
    %c0_i32 = arith.constant 0 : i32
    %c0_i32_0 = arith.constant 0 : i32
    %c0_i32_1 = arith.constant 0 : i32
    return %c0_i32, %c0_i32_0 : i32, i32
  }
  func.func @transform_6(%arg0: i32) -> (i32, i32) {
    %c0_i32 = arith.constant 0 : i32
    %c0_i32_0 = arith.constant 0 : i32
    %c0_i32_1 = arith.constant 0 : i32
    return %c0_i32, %c0_i32_0 : i32, i32
  }
  func.func @transform_7(%arg0: i32) -> (i32, i32) {
    %c0_i32 = arith.constant 0 : i32
    %c0_i32_0 = arith.constant 0 : i32
    return %arg0, %c0_i32 : i32, i32
  }
}

</mosaic_0001>

<llo_original>
// kernel: tpu_custom_call.1
$region0: #{tpu_custom_call.1}
  #allocation0 [shape = 'u32[]', space=smem, size = 0x4, offset = 0x4, fixed_abs, tag = 'smem constant byte address 0x4 - core index']
  #allocation1 [shape = 'u32[144,128]{1,0:T(1,128)}', space=vmem, size = 0x12000, scoped, tag = 'internal scratch']
  #allocation2 [shape = 'f32[1,1]{1,0:T(1,128)S(1)}', space=vmem, size = 0x200, scoped, tag = 'scoped memory for tpu_custom_call.1']
  %s0 = inlined_call_operand.hbm [shape: f32[50,784], index: 0, kind: input, shape index: {}]
  %s1 = inlined_call_operand.hbm [shape: bf16[784,512], index: 1, kind: input, shape index: {}]
  %s2 = inlined_call_operand.vmem [shape: f32[1,512], index: 2, kind: input, shape index: {}]
  %s3 = inlined_call_operand.hbm [shape: bf16[512,256], index: 3, kind: input, shape index: {}]
  %s4 = inlined_call_operand.vmem [shape: f32[1,256], index: 4, kind: input, shape index: {}]
  %s5 = inlined_call_operand.vmem [shape: f32[1,256], index: 5, kind: input, shape index: {}]
  %s6 = inlined_call_operand.<no memory space> [shape: f32[1,1], index: 6, kind: input, shape index: {}]
  %s7 = inlined_call_operand.vmem [shape: f32[50,1], index: 7, kind: output, shape index: {}]
  %s8 = sld [smem:[#allocation0]]
  $region121: #{tpu_custom_call.1} parent=0
    _
  %s10 = ssub.s32 1, %s8
  %s11 = scalar_select 0, %s10, %s8
  %v12 = vstv %s6
  %13 = vst [vmem:[#allocation2] sm:$0x1] %v12
  $region1: #{tpu_custom_call.1} parent=0
    #allocation3 [shape = 'u8[229376]{0}', space=vmem, size = 0x38000, scoped, tag = 'input window, operand 0']
    #allocation4 [shape = 's32[2]{0}', space=sflag, size = 0x8, scoped, tag = 'scoped memory for tpu_custom_call.1']
    #allocation5 [shape = 'u8[802816]{0}', space=vmem, size = 0xc4000, scoped, tag = 'input window, operand 1, single buffered']
    #allocation6 [shape = 's32[1]{0}', space=sflag, size = 0x4, scoped, tag = 'scoped memory for tpu_custom_call.1']
    #allocation7 [shape = 'u8[262144]{0}', space=vmem, size = 0x40000, scoped, tag = 'input window, operand 3, single buffered']
    #allocation8 [shape = 'u8[32768]{0}', space=vmem, size = 0x8000, scoped, tag = 'output window, operand 0']
    %14 = vsyncpa [#allocation4], 0
    %s15 = scalar_lea.sflag [#allocation4], 1
    %16 = vsyncpa %s15, 0
    %17 = vsyncpa [#allocation6], 0
    loop: start=0, step=1, limit=4
    $region2: #{tpu_custom_call.1} parent=1 // loop_pre_header
      _
    $region3: #{tpu_custom_call.1} parent=1 // loop_header
      %s19 = sphi 0, %s23
      %p20 = scmp.ge.s32.totalorder %s19, 4
      %s29 = sphi 0, %s31
      %s32 = sphi 0, %s29
      %s33 = sphi 0, %s32
      %s49 = sphi 0, %s33
      %s53 = sphi 0, %s53
      %s55 = sphi 0, %s53
      %s56 = sphi 0, %s55
      %s70 = sphi 0, %s56
      %s74 = sphi 0, %s74
      %s76 = sphi 0, %s74
      %s77 = sphi 0, %s76
      %s91 = sphi 0, %s77
      %s95 = sphi 0, %s95
      %s97 = sphi 0, %s95
      %s98 = sphi 0, %s97
      %s112 = sphi 0, %s98
      %s116 = sphi 0, %s116
      %s118 = sphi 0, %s116
      %s119 = sphi 0, %s118
      %s133 = sphi 0, %s119
      %s137 = sphi 0, %s137
      %s139 = sphi 0, %s137
      %s140 = sphi 0, %s139
      %s154 = sphi 0, %s140
      %s158 = sphi 0, %s158
      %s160 = sphi 0, %s158
      %s161 = sphi 0, %s160
      %s175 = sphi 0, %s161
      %s181 = sphi 0, %s183
      %s184 = sphi 0, %s181
      %s185 = sphi 0, %s184
      %s201 = sphi 0, %s185
    $region4: #{tpu_custom_call.1} parent=1 // loop_header_branch
      %22 = sbr.rel (%p20) target = $region8
    $region5: #{tpu_custom_call.1} parent=1 // loop_body
      %s24 = ssub.s32 %s19, 1
      %s25 = ssub.s32 %s19, 2
      %s26 = sadd.s32 %s19, 1
      %s27 = ssub.s32 %s19, %s26
      %p28 = scmp.eq.s32.totalorder %s27, 0
      %s30 = sadd.s32 %s29, 1
      %s31 = scalar_select %p28, %s29, %s30
      %p34 = pneg %p28
      %p35 = scmp.eq.s32.totalorder %s19, 1
      %p36 = por %p34, %p35
      %p37 = scmp.ne.s32.totalorder %s29, %s32
      %p38 = scmp.eq.s32.totalorder %s19, 0
      %p39 = por %p37, %p38
      %p40 = scmp.ne.s32.totalorder %s29, %s32
      %p41 = scmp.eq.s32.totalorder %s24, 1
      %p42 = por %p40, %p41
      %p43 = scmp.ne.s32.totalorder %s32, %s33
      %p44 = scmp.eq.s32.totalorder %s24, 0
      %p45 = por %p43, %p44
      %p46 = scmp.ne.s32.totalorder %s32, %s33
      %p47 = scmp.eq.s32.totalorder %s25, 1
      %p48 = por %p46, %p47
      %p50 = scmp.ne.s32.totalorder %s33, %s49
      %p51 = scmp.eq.s32.totalorder %s25, 0
      %p52 = por %p50, %p51
      %s54 = sadd.s32 %s53, 1
      %p57 = scmp.eq.s32.totalorder %s19, 1
      %p58 = scmp.ne.s32.totalorder %s53, %s55
      %p59 = scmp.eq.s32.totalorder %s19, 0
      %p60 = por %p58, %p59
      %p61 = scmp.ne.s32.totalorder %s53, %s55
      %p62 = scmp.eq.s32.totalorder %s24, 1
      %p63 = por %p61, %p62
      %p64 = scmp.ne.s32.totalorder %s55, %s56
      %p65 = scmp.eq.s32.totalorder %s24, 0
      %p66 = por %p64, %p65
      %p67 = scmp.ne.s32.totalorder %s55, %s56
      %p68 = scmp.eq.s32.totalorder %s25, 1
      %p69 = por %p67, %p68
      %p71 = scmp.ne.s32.totalorder %s56, %s70
      %p72 = scmp.eq.s32.totalorder %s25, 0
      %p73 = por %p71, %p72
      %s75 = sadd.s32 %s74, 1
      %p78 = scmp.eq.s32.totalorder %s19, 1
      %p79 = scmp.ne.s32.totalorder %s74, %s76
      %p80 = scmp.eq.s32.totalorder %s19, 0
      %p81 = por %p79, %p80
      %p82 = scmp.ne.s32.totalorder %s74, %s76
      %p83 = scmp.eq.s32.totalorder %s24, 1
      %p84 = por %p82, %p83
      %p85 = scmp.ne.s32.totalorder %s76, %s77
      %p86 = scmp.eq.s32.totalorder %s24, 0
      %p87 = por %p85, %p86
      %p88 = scmp.ne.s32.totalorder %s76, %s77
      %p89 = scmp.eq.s32.totalorder %s25, 1
      %p90 = por %p88, %p89
      %p92 = scmp.ne.s32.totalorder %s77, %s91
      %p93 = scmp.eq.s32.totalorder %s25, 0
      %p94 = por %p92, %p93
      %s96 = sadd.s32 %s95, 1
      %p99 = scmp.eq.s32.totalorder %s19, 1
      %p100 = scmp.ne.s32.totalorder %s95, %s97
      %p101 = scmp.eq.s32.totalorder %s19, 0
      %p102 = por %p100, %p101
      %p103 = scmp.ne.s32.totalorder %s95, %s97
      %p104 = scmp.eq.s32.totalorder %s24, 1
      %p105 = por %p103, %p104
      %p106 = scmp.ne.s32.totalorder %s97, %s98
      %p107 = scmp.eq.s32.totalorder %s24, 0
      %p108 = por %p106, %p107
      %p109 = scmp.ne.s32.totalorder %s97, %s98
      %p110 = scmp.eq.s32.totalorder %s25, 1
      %p111 = por %p109, %p110
      %p113 = scmp.ne.s32.totalorder %s98, %s112
      %p114 = scmp.eq.s32.totalorder %s25, 0
      %p115 = por %p113, %p114
      %s117 = sadd.s32 %s116, 1
      %p120 = scmp.eq.s32.totalorder %s19, 1
      %p121 = scmp.ne.s32.totalorder %s116, %s118
      %p122 = scmp.eq.s32.totalorder %s19, 0
      %p123 = por %p121, %p122
      %p124 = scmp.ne.s32.totalorder %s116, %s118
      %p125 = scmp.eq.s32.totalorder %s24, 1
      %p126 = por %p124, %p125
      %p127 = scmp.ne.s32.totalorder %s118, %s119
      %p128 = scmp.eq.s32.totalorder %s24, 0
      %p129 = por %p127, %p128
      %p130 = scmp.ne.s32.totalorder %s118, %s119
      %p131 = scmp.eq.s32.totalorder %s25, 1
      %p132 = por %p130, %p131
      %p134 = scmp.ne.s32.totalorder %s119, %s133
      %p135 = scmp.eq.s32.totalorder %s25, 0
      %p136 = por %p134, %p135
      %s138 = sadd.s32 %s137, 1
      %p141 = scmp.eq.s32.totalorder %s19, 1
      %p142 = scmp.ne.s32.totalorder %s137, %s139
      %p143 = scmp.eq.s32.totalorder %s19, 0
      %p144 = por %p142, %p143
      %p145 = scmp.ne.s32.totalorder %s137, %s139
      %p146 = scmp.eq.s32.totalorder %s24, 1
      %p147 = por %p145, %p146
      %p148 = scmp.ne.s32.totalorder %s139, %s140
      %p149 = scmp.eq.s32.totalorder %s24, 0
      %p150 = por %p148, %p149
      %p151 = scmp.ne.s32.totalorder %s139, %s140
      %p152 = scmp.eq.s32.totalorder %s25, 1
      %p153 = por %p151, %p152
      %p155 = scmp.ne.s32.totalorder %s140, %s154
      %p156 = scmp.eq.s32.totalorder %s25, 0
      %p157 = por %p155, %p156
      %s159 = sadd.s32 %s158, 1
      %p162 = scmp.eq.s32.totalorder %s19, 1
      %p163 = scmp.ne.s32.totalorder %s158, %s160
      %p164 = scmp.eq.s32.totalorder %s19, 0
      %p165 = por %p163, %p164
      %p166 = scmp.ne.s32.totalorder %s158, %s160
      %p167 = scmp.eq.s32.totalorder %s24, 1
      %p168 = por %p166, %p167
      %p169 = scmp.ne.s32.totalorder %s160, %s161
      %p170 = scmp.eq.s32.totalorder %s24, 0
      %p171 = por %p169, %p170
      %p172 = scmp.ne.s32.totalorder %s160, %s161
      %p173 = scmp.eq.s32.totalorder %s25, 1
      %p174 = por %p172, %p173
      %p176 = scmp.ne.s32.totalorder %s161, %s175
      %p177 = scmp.eq.s32.totalorder %s25, 0
      %p178 = por %p176, %p177
      %s179 = ssub.s32 %s19, %s26
      %p180 = scmp.eq.s32.totalorder %s179, 0
      %s182 = sadd.s32 %s181, 1
      %s183 = scalar_select %p180, %s181, %s182
      %p186 = pneg %p180
      %p187 = scmp.eq.s32.totalorder %s19, 1
      %p188 = por %p186, %p187
      %p189 = scmp.ne.s32.totalorder %s181, %s184
      %p190 = scmp.eq.s32.totalorder %s19, 0
      %p191 = por %p189, %p190
      %p192 = scmp.ne.s32.totalorder %s181, %s184
      %p193 = scmp.eq.s32.totalorder %s24, 1
      %p194 = por %p192, %p193
      %p195 = scmp.ne.s32.totalorder %s184, %s185
      %p196 = scmp.eq.s32.totalorder %s24, 0
      %p197 = por %p195, %p196
      %p198 = scmp.ne.s32.totalorder %s184, %s185
      %p199 = scmp.eq.s32.totalorder %s25, 1
      %p200 = por %p198, %p199
      %p202 = scmp.ne.s32.totalorder %s185, %s201
      %p203 = scmp.eq.s32.totalorder %s25, 0
      %p204 = por %p202, %p203
      %p205 = scmp.le.s32.totalorder 1, %s19
      %p206 = scmp.lt.s32.totalorder %s19, 3
      %p207 = pnand %p205, %p206
      %p208 = pneg %p207
      // Predicated region
      $region9: #{tpu_custom_call.1} parent=5 // pred_check
        _
      $region10: #{tpu_custom_call.1} parent=5 // pred_check_branch
        %210 = sbr.rel (%p207) target = $region12
      $region11: #{tpu_custom_call.1} parent=5 // pred_region
        %s211 = ssub.s32 %s19, 1
        // Predicated region
        $region13: #{tpu_custom_call.1} parent=11 // pred_check
          %p212 = pneg %p66
        $region14: #{tpu_custom_call.1} parent=11 // pred_check_branch
          %214 = sbr.rel (%p212) target = $region16
        $region15: #{tpu_custom_call.1} parent=11 // pred_region
          %s216 = ssub.s32 25088, 25088
          %217 = vsyncadd [#allocation6], %s216
          %s218 = sshll.u32 [#allocation5], 4
          %s219 = int_to_ptr.vmem [resolvable:$true] %s218
          %224 = dma.hbm_to_vmem [thread:$0]  %s1, 25088, %s219, [#allocation6], 256, 256, 16
        $region16: #{tpu_custom_call.1} parent=11 // pred_fallthru
          _
        // Predicated region
        $region17: #{tpu_custom_call.1} parent=11 // pred_check
          %p225 = pneg %p87
        $region18: #{tpu_custom_call.1} parent=11 // pred_check_branch
          %227 = sbr.rel (%p225) target = $region20
        $region19: #{tpu_custom_call.1} parent=11 // pred_region
          _
        $region20: #{tpu_custom_call.1} parent=11 // pred_fallthru
          _
        // Predicated region
        $region21: #{tpu_custom_call.1} parent=11 // pred_check
          %p228 = pneg %p108
        $region22: #{tpu_custom_call.1} parent=11 // pred_check_branch
          %230 = sbr.rel (%p228) target = $region24
        $region23: #{tpu_custom_call.1} parent=11 // pred_region
          %s232 = ssub.s32 8192, 8192
          %233 = vsyncadd [#allocation6], %s232
          %s234 = sshll.u32 [#allocation7], 4
          %s235 = int_to_ptr.vmem [resolvable:$true] %s234
          %240 = dma.hbm_to_vmem [thread:$0]  %s3, 8192, %s235, [#allocation6], 128, 128, 8
        $region24: #{tpu_custom_call.1} parent=11 // pred_fallthru
          _
        // Predicated region
        $region25: #{tpu_custom_call.1} parent=11 // pred_check
          %p241 = pneg %p129
        $region26: #{tpu_custom_call.1} parent=11 // pred_check_branch
          %243 = sbr.rel (%p241) target = $region28
        $region27: #{tpu_custom_call.1} parent=11 // pred_region
          _
        $region28: #{tpu_custom_call.1} parent=11 // pred_fallthru
          _
        // Predicated region
        $region29: #{tpu_custom_call.1} parent=11 // pred_check
          %p244 = pneg %p150
        $region30: #{tpu_custom_call.1} parent=11 // pred_check_branch
          %246 = sbr.rel (%p244) target = $region32
        $region31: #{tpu_custom_call.1} parent=11 // pred_region
          _
        $region32: #{tpu_custom_call.1} parent=11 // pred_fallthru
          _
        // Predicated region
        $region33: #{tpu_custom_call.1} parent=11 // pred_check
          %p247 = pneg %p171
        $region34: #{tpu_custom_call.1} parent=11 // pred_check_branch
          %249 = sbr.rel (%p247) target = $region36
        $region35: #{tpu_custom_call.1} parent=11 // pred_region
          _
        $region36: #{tpu_custom_call.1} parent=11 // pred_fallthru
          _
      $region12: #{tpu_custom_call.1} parent=5 // pred_fallthru
        _
      %p250 = scmp.lt.s32.totalorder %s19, 2
      // Predicated region
      $region37: #{tpu_custom_call.1} parent=5 // pred_check
        %p251 = pneg %p250
      $region38: #{tpu_custom_call.1} parent=5 // pred_check_branch
        %253 = sbr.rel (%p251) target = $region40
      $region39: #{tpu_custom_call.1} parent=5 // pred_region
        // Predicated region
        $region41: #{tpu_custom_call.1} parent=39 // pred_check
          %p254 = pneg %p39
        $region42: #{tpu_custom_call.1} parent=39 // pred_check_branch
          %256 = sbr.rel (%p254) target = $region44
        $region43: #{tpu_custom_call.1} parent=39 // pred_region
          %s257 = sand.u32 %s29, 1
          %s258 = scalar_lea.sflag [#allocation4], %s257
          %s259 = sand.u32 %s29, 1
          %s260 = smul.addr %s259, 224
          %s261 = scalar_lea.vmem [#allocation3], %s260
          %s262 = smul.u32 4, %s19
          %s263 = ssub.s32 7, %s262
          %p264 = scmp.lt.s32.totalorder %s263, 4
          %s265 = scalar_select %p264, %s263, 4
          %s266 = smul.u32 128, %s265
          %s267 = smul.u32 %s266, 7
          %s269 = ssub.s32 3584, %s267
          %270 = vsyncadd %s258, %s269
          %p271 = scmp.ne.s32.totalorder 0, %s267
          %s272 = smul.addr %s262, 7
          %s273 = smul.addr %s272, 128
          %s274 = scalar_lea.hbm %s0, %s273
          %s275 = smul.u32 56, %s265
          %s276 = sshll.u32 %s261, 4
          %s277 = int_to_ptr.vmem [resolvable:$true] %s276
          %s278 = sshll.u32 %s275, 4
          %282 = dma.hbm_to_vmem [thread:$0]  (%p271), %s274, %s278, %s277, %s258, 896, 896, 56
        $region44: #{tpu_custom_call.1} parent=39 // pred_fallthru
          _
      $region40: #{tpu_custom_call.1} parent=5 // pred_fallthru
        _
      %p283 = scmp.le.s32.totalorder 1, %s19
      %p284 = scmp.lt.s32.totalorder %s19, 3
      %p285 = pnand %p283, %p284
      %p286 = pneg %p285
      // Predicated region
      $region45: #{tpu_custom_call.1} parent=5 // pred_check
        _
      $region46: #{tpu_custom_call.1} parent=5 // pred_check_branch
        %288 = sbr.rel (%p285) target = $region48
      $region47: #{tpu_custom_call.1} parent=5 // pred_region
        %s289 = ssub.s32 %s19, 1
        %s290 = sand.u32 %s32, 1
        %s291 = scalar_lea.sflag [#allocation4], %s290
        %s292 = sand.u32 %s32, 1
        %s293 = smul.addr %s292, 224
        %s294 = scalar_lea.vmem [#allocation3], %s293
        // Predicated region
        $region49: #{tpu_custom_call.1} parent=47 // pred_check
          %p295 = pneg %p45
        $region50: #{tpu_custom_call.1} parent=47 // pred_check_branch
          %297 = sbr.rel (%p295) target = $region52
        $region51: #{tpu_custom_call.1} parent=47 // pred_region
          %298 = dma.done %s291, 3584
        $region52: #{tpu_custom_call.1} parent=47 // pred_fallthru
          _
        // Predicated region
        $region53: #{tpu_custom_call.1} parent=47 // pred_check
          %p299 = pneg %p66
        $region54: #{tpu_custom_call.1} parent=47 // pred_check_branch
          %301 = sbr.rel (%p299) target = $region56
        $region55: #{tpu_custom_call.1} parent=47 // pred_region
          %302 = dma.done [#allocation6], 25088
        $region56: #{tpu_custom_call.1} parent=47 // pred_fallthru
          _
        // Predicated region
        $region57: #{tpu_custom_call.1} parent=47 // pred_check
          %p303 = pneg %p108
        $region58: #{tpu_custom_call.1} parent=47 // pred_check_branch
          %305 = sbr.rel (%p303) target = $region60
        $region59: #{tpu_custom_call.1} parent=47 // pred_region
          %306 = dma.done [#allocation6], 8192
        $region60: #{tpu_custom_call.1} parent=47 // pred_fallthru
          _
        %s307 = sand.u32 %s32, 1
        %s308 = scalar_lea.sflag [#allocation4], %s307
        %s309 = sand.u32 %s32, 1
        %s310 = smul.addr %s309, 224
        %s311 = scalar_lea.vmem [#allocation3], %s310
        %p312 = pneg %p45
        %p313 = pneg %p42
        %p314 = pneg %p66
        %p315 = pneg %p63
        %p316 = pneg %p87
        %p317 = pneg %p84
        %p318 = pneg %p108
        %p319 = pneg %p105
        %p320 = pneg %p129
        %p321 = pneg %p126
        %p322 = pneg %p150
        %p323 = pneg %p147
        %p324 = pneg %p171
        %p325 = pneg %p168
        %p326 = pneg %p197
        %p327 = pneg %p194
        %s328 = sand.u32 %s184, 1
        %s329 = sand.u32 %s184, 1
        %s330 = smul.addr %s329, 32
        %s331 = scalar_lea.vmem [#allocation8], %s330
        %s332 = smul.u32 4, %s24
        %s333 = ssub.s32 7, %s332
        %p334 = scmp.lt.s32.totalorder %s333, 4
        %s335 = scalar_select %p334, %s333, 4
        %s336 = smul.u32 128, %s335
        %s337 = smul.u32 %s336, 7
        %s338 = smul.u32 4, %s24
        %s339 = ssub.s32 7, %s338
        %p340 = scmp.lt.s32.totalorder %s339, 4
        %s341 = scalar_select %p340, %s339, 4
        %s342 = smul.u32 128, %s341
        %v344 = vld [vmem:[%s294] sm:$0xff]
        %v345 = vld [vmem:[%s294 + $0x8] sm:$0xff]
        %v346 = vld [vmem:[%s294 + $0x10] sm:$0xff]
        %v347 = vld [vmem:[%s294 + $0x18] sm:$0xff]
        %v348 = vld [vmem:[%s294 + $0x20] sm:$0xff]
        %v349 = vld [vmem:[%s294 + $0x28] sm:$0xff]
        %v350 = vld [vmem:[%s294 + $0x30] sm:$0xff]
        %v351 = vld [vmem:[%s294 + $0x38] sm:$0xff]
        %v352 = vld [vmem:[%s294 + $0x40] sm:$0xff]
        %v353 = vld [vmem:[%s294 + $0x48] sm:$0xff]
        %v354 = vld [vmem:[%s294 + $0x50] sm:$0xff]
        %v355 = vld [vmem:[%s294 + $0x58] sm:$0xff]
        %v356 = vld [vmem:[%s294 + $0x60] sm:$0xff]
        %v357 = vld [vmem:[%s294 + $0x68] sm:$0xff]
        %v358 = vld [vmem:[%s294 + $0x70] sm:$0xff]
        %v359 = vld [vmem:[%s294 + $0x78] sm:$0xff]
        %v360 = vld [vmem:[%s294 + $0x80] sm:$0xff]
        %v361 = vld [vmem:[%s294 + $0x88] sm:$0xff]
        %v362 = vld [vmem:[%s294 + $0x90] sm:$0xff]
        %v363 = vld [vmem:[%s294 + $0x98] sm:$0xff]
        %v364 = vld [vmem:[%s294 + $0xa0] sm:$0xff]
        %v365 = vld [vmem:[%s294 + $0xa8] sm:$0xff]
        %v366 = vld [vmem:[%s294 + $0xb0] sm:$0xff]
        %v367 = vld [vmem:[%s294 + $0xb8] sm:$0xff]
        %v368 = vld [vmem:[%s294 + $0xc0] sm:$0xff]
        %v369 = vld [vmem:[%s294 + $0xc8] sm:$0xff]
        %v370 = vld [vmem:[%s294 + $0xd0] sm:$0xff]
        %v371 = vld [vmem:[%s294 + $0xd8] sm:$0xff]
        %v372 = vpack.c.bf16 %v351, %v344
        %v373 = vpack.c.bf16 %v352, %v345
        %v374 = vpack.c.bf16 %v353, %v346
        %v375 = vpack.c.bf16 %v354, %v347
        %v376 = vpack.c.bf16 %v355, %v348
        %v377 = vpack.c.bf16 %v356, %v349
        %v378 = vpack.c.bf16 %v357, %v350
        %v379 = vpack.c.bf16 %v365, %v358
        %v380 = vpack.c.bf16 %v366, %v359
        %v381 = vpack.c.bf16 %v367, %v360
        %v382 = vpack.c.bf16 %v368, %v361
        %v383 = vpack.c.bf16 %v369, %v362
        %v384 = vpack.c.bf16 %v370, %v363
        %v385 = vpack.c.bf16 %v371, %v364
        %v386 = vld [vmem:[#allocation5] sm:$0xff]
        %v387 = vld [vmem:[#allocation5 + $0x8] sm:$0xff]
        %v388 = vld [vmem:[#allocation5 + $0x10] sm:$0xff]
        %v389 = vld [vmem:[#allocation5 + $0x18] sm:$0xff]
        %v390 = vld [vmem:[#allocation5 + $0x20] sm:$0xff]
        %v391 = vld [vmem:[#allocation5 + $0x28] sm:$0xff]
        %v392 = vld [vmem:[#allocation5 + $0x30] sm:$0xff]
        %v393 = vld [vmem:[#allocation5 + $0x38] sm:$0xff]
        %v394 = vld [vmem:[#allocation5 + $0x40] sm:$0xff]
        %v395 = vld [vmem:[#allocation5 + $0x48] sm:$0xff]
        %v396 = vld [vmem:[#allocation5 + $0x50] sm:$0xff]
        %v397 = vld [vmem:[#allocation5 + $0x58] sm:$0xff]
        %v398 = vld [vmem:[#allocation5 + $0x60] sm:$0xff]
        %v399 = vld [vmem:[#allocation5 + $0x68] sm:$0xff]
        %v400 = vld [vmem:[#allocation5 + $0x70] sm:$0xff]
        %v401 = vld [vmem:[#allocation5 + $0x78] sm:$0xff]
        %v402 = vld [vmem:[#allocation5 + $0x80] sm:$0xff]
        %v403 = vld [vmem:[#allocation5 + $0x88] sm:$0xff]
        %v404 = vld [vmem:[#allocation5 + $0x90] sm:$0xff]
        %v405 = vld [vmem:[#allocation5 + $0x98] sm:$0xff]
        %v406 = vld [vmem:[#allocation5 + $0xa0] sm:$0xff]
        %v407 = vld [vmem:[#allocation5 + $0xa8] sm:$0xff]
        %v408 = vld [vmem:[#allocation5 + $0xb0] sm:$0xff]
        %v409 = vld [vmem:[#allocation5 + $0xb8] sm:$0xff]
        %v410 = vld [vmem:[#allocation5 + $0xc0] sm:$0xff]
        %v411 = vld [vmem:[#allocation5 + $0xc8] sm:$0xff]
        %v412 = vld [vmem:[#allocation5 + $0xd0] sm:$0xff]
        %v413 = vld [vmem:[#allocation5 + $0xd8] sm:$0xff]
        %v414 = vld [vmem:[#allocation5 + $0xe0] sm:$0xff]
        %v415 = vld [vmem:[#allocation5 + $0xe8] sm:$0xff]
        %v416 = vld [vmem:[#allocation5 + $0xf0] sm:$0xff]
        %v417 = vld [vmem:[#allocation5 + $0xf8] sm:$0xff]
        %v418 = vld [vmem:[#allocation5 + $0x100] sm:$0xff]
        %v419 = vld [vmem:[#allocation5 + $0x108] sm:$0xff]
        %v420 = vld [vmem:[#allocation5 + $0x110] sm:$0xff]
        %v421 = vld [vmem:[#allocation5 + $0x118] sm:$0xff]
        %v422 = vld [vmem:[#allocation5 + $0x120] sm:$0xff]
        %v423 = vld [vmem:[#allocation5 + $0x128] sm:$0xff]
        %v424 = vld [vmem:[#allocation5 + $0x130] sm:$0xff]
        %v425 = vld [vmem:[#allocation5 + $0x138] sm:$0xff]
        %v426 = vld [vmem:[#allocation5 + $0x140] sm:$0xff]
        %v427 = vld [vmem:[#allocation5 + $0x148] sm:$0xff]
        %v428 = vld [vmem:[#allocation5 + $0x150] sm:$0xff]
        %v429 = vld [vmem:[#allocation5 + $0x158] sm:$0xff]
        %v430 = vld [vmem:[#allocation5 + $0x160] sm:$0xff]
        %v431 = vld [vmem:[#allocation5 + $0x168] sm:$0xff]
        %v432 = vld [vmem:[#allocation5 + $0x170] sm:$0xff]
        %v433 = vld [vmem:[#allocation5 + $0x178] sm:$0xff]
        %v434 = vld [vmem:[#allocation5 + $0x180] sm:$0xff]
        %v435 = vld [vmem:[#allocation5 + $0x188] sm:$0xff]
        %v436 = vld [vmem:[#allocation5 + $0x190] sm:$0xff]
        %v437 = vld [vmem:[#allocation5 + $0x198] sm:$0xff]
        %v438 = vld [vmem:[#allocation5 + $0x1a0] sm:$0xff]
        %v439 = vld [vmem:[#allocation5 + $0x1a8] sm:$0xff]
        %v440 = vld [vmem:[#allocation5 + $0x1b0] sm:$0xff]
        %v441 = vld [vmem:[#allocation5 + $0x1b8] sm:$0xff]
        %v442 = vld [vmem:[#allocation5 + $0x1c0] sm:$0xff]
        %v443 = vld [vmem:[#allocation5 + $0x1c8] sm:$0xff]
        %v444 = vld [vmem:[#allocation5 + $0x1d0] sm:$0xff]
        %v445 = vld [vmem:[#allocation5 + $0x1d8] sm:$0xff]
        %v446 = vld [vmem:[#allocation5 + $0x1e0] sm:$0xff]
        %v447 = vld [vmem:[#allocation5 + $0x1e8] sm:$0xff]
        %v448 = vld [vmem:[#allocation5 + $0x1f0] sm:$0xff]
        %v449 = vld [vmem:[#allocation5 + $0x1f8] sm:$0xff]
        %v450 = vld [vmem:[#allocation5 + $0x200] sm:$0xff]
        %v451 = vld [vmem:[#allocation5 + $0x208] sm:$0xff]
        %v452 = vld [vmem:[#allocation5 + $0x210] sm:$0xff]
        %v453 = vld [vmem:[#allocation5 + $0x218] sm:$0xff]
        %v454 = vld [vmem:[#allocation5 + $0x220] sm:$0xff]
        %v455 = vld [vmem:[#allocation5 + $0x228] sm:$0xff]
        %v456 = vld [vmem:[#allocation5 + $0x230] sm:$0xff]
        %v457 = vld [vmem:[#allocation5 + $0x238] sm:$0xff]
        %v458 = vld [vmem:[#allocation5 + $0x240] sm:$0xff]
        %v459 = vld [vmem:[#allocation5 + $0x248] sm:$0xff]
        %v460 = vld [vmem:[#allocation5 + $0x250] sm:$0xff]
        %v461 = vld [vmem:[#allocation5 + $0x258] sm:$0xff]
        %v462 = vld [vmem:[#allocation5 + $0x260] sm:$0xff]
        %v463 = vld [vmem:[#allocation5 + $0x268] sm:$0xff]
        %v464 = vld [vmem:[#allocation5 + $0x270] sm:$0xff]
        %v465 = vld [vmem:[#allocation5 + $0x278] sm:$0xff]
        %v466 = vld [vmem:[#allocation5 + $0x280] sm:$0xff]
        %v467 = vld [vmem:[#allocation5 + $0x288] sm:$0xff]
        %v468 = vld [vmem:[#allocation5 + $0x290] sm:$0xff]
        %v469 = vld [vmem:[#allocation5 + $0x298] sm:$0xff]
        %v470 = vld [vmem:[#allocation5 + $0x2a0] sm:$0xff]
        %v471 = vld [vmem:[#allocation5 + $0x2a8] sm:$0xff]
        %v472 = vld [vmem:[#allocation5 + $0x2b0] sm:$0xff]
        %v473 = vld [vmem:[#allocation5 + $0x2b8] sm:$0xff]
        %v474 = vld [vmem:[#allocation5 + $0x2c0] sm:$0xff]
        %v475 = vld [vmem:[#allocation5 + $0x2c8] sm:$0xff]
        %v476 = vld [vmem:[#allocation5 + $0x2d0] sm:$0xff]
        %v477 = vld [vmem:[#allocation5 + $0x2d8] sm:$0xff]
        %v478 = vld [vmem:[#allocation5 + $0x2e0] sm:$0xff]
        %v479 = vld [vmem:[#allocation5 + $0x2e8] sm:$0xff]
        %v480 = vld [vmem:[#allocation5 + $0x2f0] sm:$0xff]
        %v481 = vld [vmem:[#allocation5 + $0x2f8] sm:$0xff]
        %v482 = vld [vmem:[#allocation5 + $0x300] sm:$0xff]
        %v483 = vld [vmem:[#allocation5 + $0x308] sm:$0xff]
        %v484 = vld [vmem:[#allocation5 + $0x310] sm:$0xff]
        %v485 = vld [vmem:[#allocation5 + $0x318] sm:$0xff]
        %v486 = vld [vmem:[#allocation5 + $0x320] sm:$0xff]
        %v487 = vld [vmem:[#allocation5 + $0x328] sm:$0xff]
        %v488 = vld [vmem:[#allocation5 + $0x330] sm:$0xff]
        %v489 = vld [vmem:[#allocation5 + $0x338] sm:$0xff]
        %v490 = vld [vmem:[#allocation5 + $0x340] sm:$0xff]
        %v491 = vld [vmem:[#allocation5 + $0x348] sm:$0xff]
        %v492 = vld [vmem:[#allocation5 + $0x350] sm:$0xff]
        %v493 = vld [vmem:[#allocation5 + $0x358] sm:$0xff]
        %v494 = vld [vmem:[#allocation5 + $0x360] sm:$0xff]
        %v495 = vld [vmem:[#allocation5 + $0x368] sm:$0xff]
        %v496 = vld [vmem:[#allocation5 + $0x370] sm:$0xff]
        %v497 = vld [vmem:[#allocation5 + $0x378] sm:$0xff]
        %v498 = vld [vmem:[#allocation5 + $0x380] sm:$0xff]
        %v499 = vld [vmem:[#allocation5 + $0x388] sm:$0xff]
        %v500 = vld [vmem:[#allocation5 + $0x390] sm:$0xff]
        %v501 = vld [vmem:[#allocation5 + $0x398] sm:$0xff]
        %v502 = vld [vmem:[#allocation5 + $0x3a0] sm:$0xff]
        %v503 = vld [vmem:[#allocation5 + $0x3a8] sm:$0xff]
        %v504 = vld [vmem:[#allocation5 + $0x3b0] sm:$0xff]
        %v505 = vld [vmem:[#allocation5 + $0x3b8] sm:$0xff]
        %v506 = vld [vmem:[#allocation5 + $0x3c0] sm:$0xff]
        %v507 = vld [vmem:[#allocation5 + $0x3c8] sm:$0xff]
        %v508 = vld [vmem:[#allocation5 + $0x3d0] sm:$0xff]
        %v509 = vld [vmem:[#allocation5 + $0x3d8] sm:$0xff]
        %v510 = vld [vmem:[#allocation5 + $0x3e0] sm:$0xff]
        %v511 = vld [vmem:[#allocation5 + $0x3e8] sm:$0xff]
        %v512 = vld [vmem:[#allocation5 + $0x3f0] sm:$0xff]
        %v513 = vld [vmem:[#allocation5 + $0x3f8] sm:$0xff]
        %v514 = vld [vmem:[#allocation5 + $0x400] sm:$0xff]
        %v515 = vld [vmem:[#allocation5 + $0x408] sm:$0xff]
        %v516 = vld [vmem:[#allocation5 + $0x410] sm:$0xff]
        %v517 = vld [vmem:[#allocation5 + $0x418] sm:$0xff]
        %v518 = vld [vmem:[#allocation5 + $0x420] sm:$0xff]
        %v519 = vld [vmem:[#allocation5 + $0x428] sm:$0xff]
        %v520 = vld [vmem:[#allocation5 + $0x430] sm:$0xff]
        %v521 = vld [vmem:[#allocation5 + $0x438] sm:$0xff]
        %v522 = vld [vmem:[#allocation5 + $0x440] sm:$0xff]
        %v523 = vld [vmem:[#allocation5 + $0x448] sm:$0xff]
        %v524 = vld [vmem:[#allocation5 + $0x450] sm:$0xff]
        %v525 = vld [vmem:[#allocation5 + $0x458] sm:$0xff]
        %v526 = vld [vmem:[#allocation5 + $0x460] sm:$0xff]
        %v527 = vld [vmem:[#allocation5 + $0x468] sm:$0xff]
        %v528 = vld [vmem:[#allocation5 + $0x470] sm:$0xff]
        %v529 = vld [vmem:[#allocation5 + $0x478] sm:$0xff]
        %v530 = vld [vmem:[#allocation5 + $0x480] sm:$0xff]
        %v531 = vld [vmem:[#allocation5 + $0x488] sm:$0xff]
        %v532 = vld [vmem:[#allocation5 + $0x490] sm:$0xff]
        %v533 = vld [vmem:[#allocation5 + $0x498] sm:$0xff]
        %v534 = vld [vmem:[#allocation5 + $0x4a0] sm:$0xff]
        %v535 = vld [vmem:[#allocation5 + $0x4a8] sm:$0xff]
        %v536 = vld [vmem:[#allocation5 + $0x4b0] sm:$0xff]
        %v537 = vld [vmem:[#allocation5 + $0x4b8] sm:$0xff]
        %v538 = vld [vmem:[#allocation5 + $0x4c0] sm:$0xff]
        %v539 = vld [vmem:[#allocation5 + $0x4c8] sm:$0xff]
        %v540 = vld [vmem:[#allocation5 + $0x4d0] sm:$0xff]
        %v541 = vld [vmem:[#allocation5 + $0x4d8] sm:$0xff]
        %v542 = vld [vmem:[#allocation5 + $0x4e0] sm:$0xff]
        %v543 = vld [vmem:[#allocation5 + $0x4e8] sm:$0xff]
        %v544 = vld [vmem:[#allocation5 + $0x4f0] sm:$0xff]
        %v545 = vld [vmem:[#allocation5 + $0x4f8] sm:$0xff]
        %v546 = vld [vmem:[#allocation5 + $0x500] sm:$0xff]
        %v547 = vld [vmem:[#allocation5 + $0x508] sm:$0xff]
        %v548 = vld [vmem:[#allocation5 + $0x510] sm:$0xff]
        %v549 = vld [vmem:[#allocation5 + $0x518] sm:$0xff]
        %v550 = vld [vmem:[#allocation5 + $0x520] sm:$0xff]
        %v551 = vld [vmem:[#allocation5 + $0x528] sm:$0xff]
        %v552 = vld [vmem:[#allocation5 + $0x530] sm:$0xff]
        %v553 = vld [vmem:[#allocation5 + $0x538] sm:$0xff]
        %v554 = vld [vmem:[#allocation5 + $0x540] sm:$0xff]
        %v555 = vld [vmem:[#allocation5 + $0x548] sm:$0xff]
        %v556 = vld [vmem:[#allocation5 + $0x550] sm:$0xff]
        %v557 = vld [vmem:[#allocation5 + $0x558] sm:$0xff]
        %v558 = vld [vmem:[#allocation5 + $0x560] sm:$0xff]
        %v559 = vld [vmem:[#allocation5 + $0x568] sm:$0xff]
        %v560 = vld [vmem:[#allocation5 + $0x570] sm:$0xff]
        %v561 = vld [vmem:[#allocation5 + $0x578] sm:$0xff]
        %v562 = vld [vmem:[#allocation5 + $0x580] sm:$0xff]
        %v563 = vld [vmem:[#allocation5 + $0x588] sm:$0xff]
        %v564 = vld [vmem:[#allocation5 + $0x590] sm:$0xff]
        %v565 = vld [vmem:[#allocation5 + $0x598] sm:$0xff]
        %v566 = vld [vmem:[#allocation5 + $0x5a0] sm:$0xff]
        %v567 = vld [vmem:[#allocation5 + $0x5a8] sm:$0xff]
        %v568 = vld [vmem:[#allocation5 + $0x5b0] sm:$0xff]
        %v569 = vld [vmem:[#allocation5 + $0x5b8] sm:$0xff]
        %v570 = vld [vmem:[#allocation5 + $0x5c0] sm:$0xff]
        %v571 = vld [vmem:[#allocation5 + $0x5c8] sm:$0xff]
        %v572 = vld [vmem:[#allocation5 + $0x5d0] sm:$0xff]
        %v573 = vld [vmem:[#allocation5 + $0x5d8] sm:$0xff]
        %v574 = vld [vmem:[#allocation5 + $0x5e0] sm:$0xff]
        %v575 = vld [vmem:[#allocation5 + $0x5e8] sm:$0xff]
        %v576 = vld [vmem:[#allocation5 + $0x5f0] sm:$0xff]
        %v577 = vld [vmem:[#allocation5 + $0x5f8] sm:$0xff]
        %v578 = vld [vmem:[#allocation5 + $0x600] sm:$0xff]
        %v579 = vld [vmem:[#allocation5 + $0x608] sm:$0xff]
        %v580 = vld [vmem:[#allocation5 + $0x610] sm:$0xff]
        %v581 = vld [vmem:[#allocation5 + $0x618] sm:$0xff]
        %v582 = vld [vmem:[%s2] sm:$0xf]
        %v584 = vlaneseq
        %v585 = vshrl.u32 %v584, 7
        %v586 = vsub.s32 0, %v585
        %v587 = vrot.slane %v582, %v586
        %v588 = vlaneseq
        %v589 = vshrl.u32 %v588, 7
        %v590 = vsub.s32 1, %v589
        %v591 = vrot.slane %v582, %v590
        %v592 = vlaneseq
        %v593 = vshrl.u32 %v592, 7
        %v594 = vsub.s32 2, %v593
        %v595 = vrot.slane %v582, %v594
        %v596 = vlaneseq
        %v597 = vshrl.u32 %v596, 7
        %v598 = vsub.s32 3, %v597
        %v599 = vrot.slane %v582, %v598
        %v800 = vunpack.c.l.b16 %v386
        %v801 = vunpack.c.h.b16 %v386
        %v802 = vunpack.c.l.b16 %v387
        %v803 = vunpack.c.h.b16 %v387
        %v804 = vunpack.c.l.b16 %v388
        %v805 = vunpack.c.h.b16 %v388
        %v806 = vunpack.c.l.b16 %v389
        %v807 = vunpack.c.h.b16 %v389
        %v808 = vunpack.c.l.b16 %v390
        %v809 = vunpack.c.h.b16 %v390
        %v810 = vunpack.c.l.b16 %v391
        %v811 = vunpack.c.h.b16 %v391
        %v812 = vunpack.c.l.b16 %v392
        %v813 = vunpack.c.h.b16 %v392
        %v814 = vunpack.c.l.b16 %v393
        %v815 = vunpack.c.h.b16 %v393
        %v816 = vunpack.c.l.b16 %v394
        %v817 = vunpack.c.h.b16 %v394
        %v818 = vunpack.c.l.b16 %v395
        %v819 = vunpack.c.h.b16 %v395
        %v820 = vunpack.c.l.b16 %v396
        %v821 = vunpack.c.h.b16 %v396
        %v822 = vunpack.c.l.b16 %v397
        %v823 = vunpack.c.h.b16 %v397
        %v824 = vunpack.c.l.b16 %v398
        %v825 = vunpack.c.h.b16 %v398
        %v826 = vunpack.c.l.b16 %v399
        %v827 = vunpack.c.h.b16 %v399
        %v828 = vunpack.c.l.b16 %v400
        %v829 = vunpack.c.h.b16 %v400
        %v830 = vunpack.c.l.b16 %v401
        %v831 = vunpack.c.h.b16 %v401
        %v832 = vunpack.c.l.b16 %v402
        %v833 = vunpack.c.h.b16 %v402
        %v834 = vunpack.c.l.b16 %v403
        %v835 = vunpack.c.h.b16 %v403
        %v836 = vunpack.c.l.b16 %v404
        %v837 = vunpack.c.h.b16 %v404
        %v838 = vunpack.c.l.b16 %v405
        %v839 = vunpack.c.h.b16 %v405
        %v840 = vunpack.c.l.b16 %v406
        %v841 = vunpack.c.h.b16 %v406
        %v842 = vunpack.c.l.b16 %v407
        %v843 = vunpack.c.h.b16 %v407
        %v844 = vunpack.c.l.b16 %v408
        %v845 = vunpack.c.h.b16 %v408
        %v846 = vunpack.c.l.b16 %v409
        %v847 = vunpack.c.h.b16 %v409
        %v848 = vunpack.c.l.b16 %v410
        %v849 = vunpack.c.h.b16 %v410
        %v850 = vunpack.c.l.b16 %v411
        %v851 = vunpack.c.h.b16 %v411
        %v852 = vunpack.c.l.b16 %v412
        %v853 = vunpack.c.h.b16 %v412
        %v854 = vunpack.c.l.b16 %v413
        %v855 = vunpack.c.h.b16 %v413
        %v856 = vunpack.c.l.b16 %v414
        %v857 = vunpack.c.h.b16 %v414
        %v858 = vunpack.c.l.b16 %v415
        %v859 = vunpack.c.h.b16 %v415
        %v860 = vunpack.c.l.b16 %v416
        %v861 = vunpack.c.h.b16 %v416
        %v862 = vunpack.c.l.b16 %v417
        %v863 = vunpack.c.h.b16 %v417
        %v864 = vunpack.c.l.b16 %v418
        %v865 = vunpack.c.h.b16 %v418
        %v866 = vunpack.c.l.b16 %v419
        %v867 = vunpack.c.h.b16 %v419
        %v868 = vunpack.c.l.b16 %v420
        %v869 = vunpack.c.h.b16 %v420
        %v870 = vunpack.c.l.b16 %v421
        %v871 = vunpack.c.h.b16 %v421
        %v872 = vunpack.c.l.b16 %v422
        %v873 = vunpack.c.h.b16 %v422
        %v874 = vunpack.c.l.b16 %v423
        %v875 = vunpack.c.h.b16 %v423
        %v876 = vunpack.c.l.b16 %v424
        %v877 = vunpack.c.h.b16 %v424
        %v878 = vunpack.c.l.b16 %v425
        %v879 = vunpack.c.h.b16 %v425
        %v880 = vunpack.c.l.b16 %v426
        %v881 = vunpack.c.h.b16 %v426
        %v882 = vunpack.c.l.b16 %v427
        %v883 = vunpack.c.h.b16 %v427
        %v884 = vunpack.c.l.b16 %v428
        %v885 = vunpack.c.h.b16 %v428
        %v886 = vunpack.c.l.b16 %v429
        %v887 = vunpack.c.h.b16 %v429
        %v888 = vunpack.c.l.b16 %v430
        %v889 = vunpack.c.h.b16 %v430
        %v890 = vunpack.c.l.b16 %v431
        %v891 = vunpack.c.h.b16 %v431
        %v892 = vunpack.c.l.b16 %v432
        %v893 = vunpack.c.h.b16 %v432
        %v894 = vunpack.c.l.b16 %v433
        %v895 = vunpack.c.h.b16 %v433
        %v896 = vunpack.c.l.b16 %v434
        %v897 = vunpack.c.h.b16 %v434
        %v898 = vunpack.c.l.b16 %v435
        %v899 = vunpack.c.h.b16 %v435
        %v900 = vunpack.c.l.b16 %v436
        %v901 = vunpack.c.h.b16 %v436
        %v902 = vunpack.c.l.b16 %v437
        %v903 = vunpack.c.h.b16 %v437
        %v904 = vunpack.c.l.b16 %v438
        %v905 = vunpack.c.h.b16 %v438
        %v906 = vunpack.c.l.b16 %v439
        %v907 = vunpack.c.h.b16 %v439
        %v908 = vunpack.c.l.b16 %v440
        %v909 = vunpack.c.h.b16 %v440
        %v910 = vunpack.c.l.b16 %v441
        %v911 = vunpack.c.h.b16 %v441
        %v912 = vunpack.c.l.b16 %v442
        %v913 = vunpack.c.h.b16 %v442
        %v914 = vunpack.c.l.b16 %v443
        %v915 = vunpack.c.h.b16 %v443
        %v916 = vunpack.c.l.b16 %v444
        %v917 = vunpack.c.h.b16 %v444
        %v918 = vunpack.c.l.b16 %v445
        %v919 = vunpack.c.h.b16 %v445
        %v920 = vunpack.c.l.b16 %v446
        %v921 = vunpack.c.h.b16 %v446
        %v922 = vunpack.c.l.b16 %v447
        %v923 = vunpack.c.h.b16 %v447
        %v924 = vunpack.c.l.b16 %v448
        %v925 = vunpack.c.h.b16 %v448
        %v926 = vunpack.c.l.b16 %v449
        %v927 = vunpack.c.h.b16 %v449
        %v928 = vunpack.c.l.b16 %v450
        %v929 = vunpack.c.h.b16 %v450
        %v930 = vunpack.c.l.b16 %v451
        %v931 = vunpack.c.h.b16 %v451
        %v932 = vunpack.c.l.b16 %v452
        %v933 = vunpack.c.h.b16 %v452
        %v934 = vunpack.c.l.b16 %v453
        %v935 = vunpack.c.h.b16 %v453
        %v936 = vunpack.c.l.b16 %v454
        %v937 = vunpack.c.h.b16 %v454
        %v938 = vunpack.c.l.b16 %v455
        %v939 = vunpack.c.h.b16 %v455
        %v940 = vunpack.c.l.b16 %v456
        %v941 = vunpack.c.h.b16 %v456
        %v942 = vunpack.c.l.b16 %v457
        %v943 = vunpack.c.h.b16 %v457
        %v944 = vunpack.c.l.b16 %v458
        %v945 = vunpack.c.h.b16 %v458
        %v946 = vunpack.c.l.b16 %v459
        %v947 = vunpack.c.h.b16 %v459
        %v948 = vunpack.c.l.b16 %v460
        %v949 = vunpack.c.h.b16 %v460
        %v950 = vunpack.c.l.b16 %v461
        %v951 = vunpack.c.h.b16 %v461
        %v952 = vunpack.c.l.b16 %v462
        %v953 = vunpack.c.h.b16 %v462
        %v954 = vunpack.c.l.b16 %v463
        %v955 = vunpack.c.h.b16 %v463
        %v956 = vunpack.c.l.b16 %v464
        %v957 = vunpack.c.h.b16 %v464
        %v958 = vunpack.c.l.b16 %v465
        %v959 = vunpack.c.h.b16 %v465
        %v960 = vunpack.c.l.b16 %v466
        %v961 = vunpack.c.h.b16 %v466
        %v962 = vunpack.c.l.b16 %v467
        %v963 = vunpack.c.h.b16 %v467
        %v964 = vunpack.c.l.b16 %v468
        %v965 = vunpack.c.h.b16 %v468
        %v966 = vunpack.c.l.b16 %v469
        %v967 = vunpack.c.h.b16 %v469
        %v968 = vunpack.c.l.b16 %v470
        %v969 = vunpack.c.h.b16 %v470
        %v970 = vunpack.c.l.b16 %v471
        %v971 = vunpack.c.h.b16 %v471
        %v972 = vunpack.c.l.b16 %v472
        %v973 = vunpack.c.h.b16 %v472
        %v974 = vunpack.c.l.b16 %v473
        %v975 = vunpack.c.h.b16 %v473
        %v976 = vunpack.c.l.b16 %v474
        %v977 = vunpack.c.h.b16 %v474
        %v978 = vunpack.c.l.b16 %v475
        %v979 = vunpack.c.h.b16 %v475
        %v980 = vunpack.c.l.b16 %v476
        %v981 = vunpack.c.h.b16 %v476
        %v982 = vunpack.c.l.b16 %v477
        %v983 = vunpack.c.h.b16 %v477
        %v984 = vunpack.c.l.b16 %v478
        %v985 = vunpack.c.h.b16 %v478
        %v986 = vunpack.c.l.b16 %v479
        %v987 = vunpack.c.h.b16 %v479
        %v988 = vunpack.c.l.b16 %v480
        %v989 = vunpack.c.h.b16 %v480
        %v990 = vunpack.c.l.b16 %v481
        %v991 = vunpack.c.h.b16 %v481
        %v992 = vunpack.c.l.b16 %v482
        %v993 = vunpack.c.h.b16 %v482
        %v994 = vunpack.c.l.b16 %v483
        %v995 = vunpack.c.h.b16 %v483
        %v996 = vunpack.c.l.b16 %v484
        %v997 = vunpack.c.h.b16 %v484
        %v998 = vunpack.c.l.b16 %v485
        %v999 = vunpack.c.h.b16 %v485
        %v1000 = vunpack.c.l.b16 %v486
        %v1001 = vunpack.c.h.b16 %v486
        %v1002 = vunpack.c.l.b16 %v487
        %v1003 = vunpack.c.h.b16 %v487
        %v1004 = vunpack.c.l.b16 %v488
        %v1005 = vunpack.c.h.b16 %v488
        %v1006 = vunpack.c.l.b16 %v489
        %v1007 = vunpack.c.h.b16 %v489
        %v1008 = vunpack.c.l.b16 %v490
        %v1009 = vunpack.c.h.b16 %v490
        %v1010 = vunpack.c.l.b16 %v491
        %v1011 = vunpack.c.h.b16 %v491
        %v1012 = vunpack.c.l.b16 %v492
        %v1013 = vunpack.c.h.b16 %v492
        %v1014 = vunpack.c.l.b16 %v493
        %v1015 = vunpack.c.h.b16 %v493
        %v1016 = vunpack.c.l.b16 %v494
        %v1017 = vunpack.c.h.b16 %v494
        %v1018 = vunpack.c.l.b16 %v495
        %v1019 = vunpack.c.h.b16 %v495
        %v1020 = vunpack.c.l.b16 %v496
        %v1021 = vunpack.c.h.b16 %v496
        %v1022 = vunpack.c.l.b16 %v497
        %v1023 = vunpack.c.h.b16 %v497
        %v1024 = vunpack.c.l.b16 %v498
        %v1025 = vunpack.c.h.b16 %v498
        %v1026 = vunpack.c.l.b16 %v499
        %v1027 = vunpack.c.h.b16 %v499
        %v1028 = vunpack.c.l.b16 %v500
        %v1029 = vunpack.c.h.b16 %v500
        %v1030 = vunpack.c.l.b16 %v501
        %v1031 = vunpack.c.h.b16 %v501
        %v1032 = vunpack.c.l.b16 %v502
        %v1033 = vunpack.c.h.b16 %v502
        %v1034 = vunpack.c.l.b16 %v503
        %v1035 = vunpack.c.h.b16 %v503
        %v1036 = vunpack.c.l.b16 %v504
        %v1037 = vunpack.c.h.b16 %v504
        %v1038 = vunpack.c.l.b16 %v505
        %v1039 = vunpack.c.h.b16 %v505
        %v1040 = vunpack.c.l.b16 %v506
        %v1041 = vunpack.c.h.b16 %v506
        %v1042 = vunpack.c.l.b16 %v507
        %v1043 = vunpack.c.h.b16 %v507
        %v1044 = vunpack.c.l.b16 %v508
        %v1045 = vunpack.c.h.b16 %v508
        %v1046 = vunpack.c.l.b16 %v509
        %v1047 = vunpack.c.h.b16 %v509
        %v1048 = vunpack.c.l.b16 %v510
        %v1049 = vunpack.c.h.b16 %v510
        %v1050 = vunpack.c.l.b16 %v511
        %v1051 = vunpack.c.h.b16 %v511
        %v1052 = vunpack.c.l.b16 %v512
        %v1053 = vunpack.c.h.b16 %v512
        %v1054 = vunpack.c.l.b16 %v513
        %v1055 = vunpack.c.h.b16 %v513
        %v1056 = vunpack.c.l.b16 %v514
        %v1057 = vunpack.c.h.b16 %v514
        %v1058 = vunpack.c.l.b16 %v515
        %v1059 = vunpack.c.h.b16 %v515
        %v1060 = vunpack.c.l.b16 %v516
        %v1061 = vunpack.c.h.b16 %v516
        %v1062 = vunpack.c.l.b16 %v517
        %v1063 = vunpack.c.h.b16 %v517
        %v1064 = vunpack.c.l.b16 %v518
        %v1065 = vunpack.c.h.b16 %v518
        %v1066 = vunpack.c.l.b16 %v519
        %v1067 = vunpack.c.h.b16 %v519
        %v1068 = vunpack.c.l.b16 %v520
        %v1069 = vunpack.c.h.b16 %v520
        %v1070 = vunpack.c.l.b16 %v521
        %v1071 = vunpack.c.h.b16 %v521
        %v1072 = vunpack.c.l.b16 %v522
        %v1073 = vunpack.c.h.b16 %v522
        %v1074 = vunpack.c.l.b16 %v523
        %v1075 = vunpack.c.h.b16 %v523
        %v1076 = vunpack.c.l.b16 %v524
        %v1077 = vunpack.c.h.b16 %v524
        %v1078 = vunpack.c.l.b16 %v525
        %v1079 = vunpack.c.h.b16 %v525
        %v1080 = vunpack.c.l.b16 %v526
        %v1081 = vunpack.c.h.b16 %v526
        %v1082 = vunpack.c.l.b16 %v527
        %v1083 = vunpack.c.h.b16 %v527
        %v1084 = vunpack.c.l.b16 %v528
        %v1085 = vunpack.c.h.b16 %v528
        %v1086 = vunpack.c.l.b16 %v529
        %v1087 = vunpack.c.h.b16 %v529
        %v1088 = vunpack.c.l.b16 %v530
        %v1089 = vunpack.c.h.b16 %v530
        %v1090 = vunpack.c.l.b16 %v531
        %v1091 = vunpack.c.h.b16 %v531
        %v1092 = vunpack.c.l.b16 %v532
        %v1093 = vunpack.c.h.b16 %v532
        %v1094 = vunpack.c.l.b16 %v533
        %v1095 = vunpack.c.h.b16 %v533
        %v1096 = vunpack.c.l.b16 %v534
        %v1097 = vunpack.c.h.b16 %v534
        %v1098 = vunpack.c.l.b16 %v535
        %v1099 = vunpack.c.h.b16 %v535
        %v1100 = vunpack.c.l.b16 %v536
        %v1101 = vunpack.c.h.b16 %v536
        %v1102 = vunpack.c.l.b16 %v537
        %v1103 = vunpack.c.h.b16 %v537
        %v1104 = vunpack.c.l.b16 %v538
        %v1105 = vunpack.c.h.b16 %v538
        %v1106 = vunpack.c.l.b16 %v539
        %v1107 = vunpack.c.h.b16 %v539
        %v1108 = vunpack.c.l.b16 %v540
        %v1109 = vunpack.c.h.b16 %v540
        %v1110 = vunpack.c.l.b16 %v541
        %v1111 = vunpack.c.h.b16 %v541
        %v1112 = vunpack.c.l.b16 %v542
        %v1113 = vunpack.c.h.b16 %v542
        %v1114 = vunpack.c.l.b16 %v543
        %v1115 = vunpack.c.h.b16 %v543
        %v1116 = vunpack.c.l.b16 %v544
        %v1117 = vunpack.c.h.b16 %v544
        %v1118 = vunpack.c.l.b16 %v545
        %v1119 = vunpack.c.h.b16 %v545
        %v1120 = vunpack.c.l.b16 %v546
        %v1121 = vunpack.c.h.b16 %v546
        %v1122 = vunpack.c.l.b16 %v547
        %v1123 = vunpack.c.h.b16 %v547
        %v1124 = vunpack.c.l.b16 %v548
        %v1125 = vunpack.c.h.b16 %v548
        %v1126 = vunpack.c.l.b16 %v549
        %v1127 = vunpack.c.h.b16 %v549
        %v1128 = vunpack.c.l.b16 %v550
        %v1129 = vunpack.c.h.b16 %v550
        %v1130 = vunpack.c.l.b16 %v551
        %v1131 = vunpack.c.h.b16 %v551
        %v1132 = vunpack.c.l.b16 %v552
        %v1133 = vunpack.c.h.b16 %v552
        %v1134 = vunpack.c.l.b16 %v553
        %v1135 = vunpack.c.h.b16 %v553
        %v1136 = vunpack.c.l.b16 %v554
        %v1137 = vunpack.c.h.b16 %v554
        %v1138 = vunpack.c.l.b16 %v555
        %v1139 = vunpack.c.h.b16 %v555
        %v1140 = vunpack.c.l.b16 %v556
        %v1141 = vunpack.c.h.b16 %v556
        %v1142 = vunpack.c.l.b16 %v557
        %v1143 = vunpack.c.h.b16 %v557
        %v1144 = vunpack.c.l.b16 %v558
        %v1145 = vunpack.c.h.b16 %v558
        %v1146 = vunpack.c.l.b16 %v559
        %v1147 = vunpack.c.h.b16 %v559
        %v1148 = vunpack.c.l.b16 %v560
        %v1149 = vunpack.c.h.b16 %v560
        %v1150 = vunpack.c.l.b16 %v561
        %v1151 = vunpack.c.h.b16 %v561
        %v1152 = vunpack.c.l.b16 %v562
        %v1153 = vunpack.c.h.b16 %v562
        %v1154 = vunpack.c.l.b16 %v563
        %v1155 = vunpack.c.h.b16 %v563
        %v1156 = vunpack.c.l.b16 %v564
        %v1157 = vunpack.c.h.b16 %v564
        %v1158 = vunpack.c.l.b16 %v565
        %v1159 = vunpack.c.h.b16 %v565
        %v1160 = vunpack.c.l.b16 %v566
        %v1161 = vunpack.c.h.b16 %v566
        %v1162 = vunpack.c.l.b16 %v567
        %v1163 = vunpack.c.h.b16 %v567
        %v1164 = vunpack.c.l.b16 %v568
        %v1165 = vunpack.c.h.b16 %v568
        %v1166 = vunpack.c.l.b16 %v569
        %v1167 = vunpack.c.h.b16 %v569
        %v1168 = vunpack.c.l.b16 %v570
        %v1169 = vunpack.c.h.b16 %v570
        %v1170 = vunpack.c.l.b16 %v571
        %v1171 = vunpack.c.h.b16 %v571
        %v1172 = vunpack.c.l.b16 %v572
        %v1173 = vunpack.c.h.b16 %v572
        %v1174 = vunpack.c.l.b16 %v573
        %v1175 = vunpack.c.h.b16 %v573
        %v1176 = vunpack.c.l.b16 %v574
        %v1177 = vunpack.c.h.b16 %v574
        %v1178 = vunpack.c.l.b16 %v575
        %v1179 = vunpack.c.h.b16 %v575
        %v1180 = vunpack.c.l.b16 %v576
        %v1181 = vunpack.c.h.b16 %v576
        %v1182 = vunpack.c.l.b16 %v577
        %v1183 = vunpack.c.h.b16 %v577
        %v1184 = vunpack.c.l.b16 %v578
        %v1185 = vunpack.c.h.b16 %v578
        %v1186 = vunpack.c.l.b16 %v579
        %v1187 = vunpack.c.h.b16 %v579
        %v1188 = vunpack.c.l.b16 %v580
        %v1189 = vunpack.c.h.b16 %v580
        %v1190 = vunpack.c.l.b16 %v581
        %v1191 = vunpack.c.h.b16 %v581
        %v1192 = vpack.c.b16 %v804, %v800
        %v1193 = vpack.c.b16 %v805, %v801
        %v1194 = vpack.c.b16 %v806, %v802
        %v1195 = vpack.c.b16 %v807, %v803
        %v1196 = vpack.c.b16 %v812, %v808
        %v1197 = vpack.c.b16 %v813, %v809
        %v1198 = vpack.c.b16 %v814, %v810
        %v1199 = vpack.c.b16 %v815, %v811
        %v1200 = vpack.c.b16 %v820, %v816
        %v1201 = vpack.c.b16 %v821, %v817
        %v1202 = vpack.c.b16 %v822, %v818
        %v1203 = vpack.c.b16 %v823, %v819
        %v1204 = vpack.c.b16 %v828, %v824
        %v1205 = vpack.c.b16 %v829, %v825
        %v1206 = vpack.c.b16 %v830, %v826
        %v1207 = vpack.c.b16 %v831, %v827
        %v1208 = vpack.c.b16 %v836, %v832
        %v1209 = vpack.c.b16 %v837, %v833
        %v1210 = vpack.c.b16 %v838, %v834
        %v1211 = vpack.c.b16 %v839, %v835
        %v1212 = vpack.c.b16 %v844, %v840
        %v1213 = vpack.c.b16 %v845, %v841
        %v1214 = vpack.c.b16 %v846, %v842
        %v1215 = vpack.c.b16 %v847, %v843
        %v1216 = vpack.c.b16 %v852, %v848
        %v1217 = vpack.c.b16 %v853, %v849
        %v1218 = vpack.c.b16 %v854, %v850
        %v1219 = vpack.c.b16 %v855, %v851
        %v1220 = vpack.c.b16 %v860, %v856
        %v1221 = vpack.c.b16 %v861, %v857
        %v1222 = vpack.c.b16 %v862, %v858
        %v1223 = vpack.c.b16 %v863, %v859
        %v1224 = vpack.c.b16 %v868, %v864
        %v1225 = vpack.c.b16 %v869, %v865
        %v1226 = vpack.c.b16 %v870, %v866
        %v1227 = vpack.c.b16 %v871, %v867
        %v1228 = vpack.c.b16 %v876, %v872
        %v1229 = vpack.c.b16 %v877, %v873
        %v1230 = vpack.c.b16 %v878, %v874
        %v1231 = vpack.c.b16 %v879, %v875
        %v1232 = vpack.c.b16 %v884, %v880
        %v1233 = vpack.c.b16 %v885, %v881
        %v1234 = vpack.c.b16 %v886, %v882
        %v1235 = vpack.c.b16 %v887, %v883
        %v1236 = vpack.c.b16 %v892, %v888
        %v1237 = vpack.c.b16 %v893, %v889
        %v1238 = vpack.c.b16 %v894, %v890
        %v1239 = vpack.c.b16 %v895, %v891
        %v1240 = vpack.c.b16 %v900, %v896
        %v1241 = vpack.c.b16 %v901, %v897
        %v1242 = vpack.c.b16 %v902, %v898
        %v1243 = vpack.c.b16 %v903, %v899
        %v1244 = vpack.c.b16 %v908, %v904
        %v1245 = vpack.c.b16 %v909, %v905
        %v1246 = vpack.c.b16 %v910, %v906
        %v1247 = vpack.c.b16 %v911, %v907
        %v1248 = vpack.c.b16 %v916, %v912
        %v1249 = vpack.c.b16 %v917, %v913
        %v1250 = vpack.c.b16 %v918, %v914
        %v1251 = vpack.c.b16 %v919, %v915
        %v1252 = vpack.c.b16 %v924, %v920
        %v1253 = vpack.c.b16 %v925, %v921
        %v1254 = vpack.c.b16 %v926, %v922
        %v1255 = vpack.c.b16 %v927, %v923
        %v1256 = vpack.c.b16 %v932, %v928
        %v1257 = vpack.c.b16 %v933, %v929
        %v1258 = vpack.c.b16 %v934, %v930
        %v1259 = vpack.c.b16 %v935, %v931
        %v1260 = vpack.c.b16 %v940, %v936
        %v1261 = vpack.c.b16 %v941, %v937
        %v1262 = vpack.c.b16 %v942, %v938
        %v1263 = vpack.c.b16 %v943, %v939
        %v1264 = vpack.c.b16 %v948, %v944
        %v1265 = vpack.c.b16 %v949, %v945
        %v1266 = vpack.c.b16 %v950, %v946
        %v1267 = vpack.c.b16 %v951, %v947
        %v1268 = vpack.c.b16 %v956, %v952
        %v1269 = vpack.c.b16 %v957, %v953
        %v1270 = vpack.c.b16 %v958, %v954
        %v1271 = vpack.c.b16 %v959, %v955
        %v1272 = vpack.c.b16 %v964, %v960
        %v1273 = vpack.c.b16 %v965, %v961
        %v1274 = vpack.c.b16 %v966, %v962
        %v1275 = vpack.c.b16 %v967, %v963
        %v1276 = vpack.c.b16 %v972, %v968
        %v1277 = vpack.c.b16 %v973, %v969
        %v1278 = vpack.c.b16 %v974, %v970
        %v1279 = vpack.c.b16 %v975, %v971
        %v1280 = vpack.c.b16 %v980, %v976
        %v1281 = vpack.c.b16 %v981, %v977
        %v1282 = vpack.c.b16 %v982, %v978
        %v1283 = vpack.c.b16 %v983, %v979
        %v1284 = vpack.c.b16 %v988, %v984
        %v1285 = vpack.c.b16 %v989, %v985
        %v1286 = vpack.c.b16 %v990, %v986
        %v1287 = vpack.c.b16 %v991, %v987
        %v1288 = vpack.c.b16 %v996, %v992
        %v1289 = vpack.c.b16 %v997, %v993
        %v1290 = vpack.c.b16 %v998, %v994
        %v1291 = vpack.c.b16 %v999, %v995
        %v1292 = vpack.c.b16 %v1004, %v1000
        %v1293 = vpack.c.b16 %v1005, %v1001
        %v1294 = vpack.c.b16 %v1006, %v1002
        %v1295 = vpack.c.b16 %v1007, %v1003
        %v1296 = vpack.c.b16 %v1012, %v1008
        %v1297 = vpack.c.b16 %v1013, %v1009
        %v1298 = vpack.c.b16 %v1014, %v1010
        %v1299 = vpack.c.b16 %v1015, %v1011
        %v1300 = vpack.c.b16 %v1020, %v1016
        %v1301 = vpack.c.b16 %v1021, %v1017
        %v1302 = vpack.c.b16 %v1022, %v1018
        %v1303 = vpack.c.b16 %v1023, %v1019
        %v1304 = vpack.c.b16 %v1028, %v1024
        %v1305 = vpack.c.b16 %v1029, %v1025
        %v1306 = vpack.c.b16 %v1030, %v1026
        %v1307 = vpack.c.b16 %v1031, %v1027
        %v1308 = vpack.c.b16 %v1036, %v1032
        %v1309 = vpack.c.b16 %v1037, %v1033
        %v1310 = vpack.c.b16 %v1038, %v1034
        %v1311 = vpack.c.b16 %v1039, %v1035
        %v1312 = vpack.c.b16 %v1044, %v1040
        %v1313 = vpack.c.b16 %v1045, %v1041
        %v1314 = vpack.c.b16 %v1046, %v1042
        %v1315 = vpack.c.b16 %v1047, %v1043
        %v1316 = vpack.c.b16 %v1052, %v1048
        %v1317 = vpack.c.b16 %v1053, %v1049
        %v1318 = vpack.c.b16 %v1054, %v1050
        %v1319 = vpack.c.b16 %v1055, %v1051
        %v1320 = vpack.c.b16 %v1060, %v1056
        %v1321 = vpack.c.b16 %v1061, %v1057
        %v1322 = vpack.c.b16 %v1062, %v1058
        %v1323 = vpack.c.b16 %v1063, %v1059
        %v1324 = vpack.c.b16 %v1068, %v1064
        %v1325 = vpack.c.b16 %v1069, %v1065
        %v1326 = vpack.c.b16 %v1070, %v1066
        %v1327 = vpack.c.b16 %v1071, %v1067
        %v1328 = vpack.c.b16 %v1076, %v1072
        %v1329 = vpack.c.b16 %v1077, %v1073
        %v1330 = vpack.c.b16 %v1078, %v1074
        %v1331 = vpack.c.b16 %v1079, %v1075
        %v1332 = vpack.c.b16 %v1084, %v1080
        %v1333 = vpack.c.b16 %v1085, %v1081
        %v1334 = vpack.c.b16 %v1086, %v1082
        %v1335 = vpack.c.b16 %v1087, %v1083
        %v1336 = vpack.c.b16 %v1092, %v1088
        %v1337 = vpack.c.b16 %v1093, %v1089
        %v1338 = vpack.c.b16 %v1094, %v1090
        %v1339 = vpack.c.b16 %v1095, %v1091
        %v1340 = vpack.c.b16 %v1100, %v1096
        %v1341 = vpack.c.b16 %v1101, %v1097
        %v1342 = vpack.c.b16 %v1102, %v1098
        %v1343 = vpack.c.b16 %v1103, %v1099
        %v1344 = vpack.c.b16 %v1108, %v1104
        %v1345 = vpack.c.b16 %v1109, %v1105
        %v1346 = vpack.c.b16 %v1110, %v1106
        %v1347 = vpack.c.b16 %v1111, %v1107
        %v1348 = vpack.c.b16 %v1116, %v1112
        %v1349 = vpack.c.b16 %v1117, %v1113
        %v1350 = vpack.c.b16 %v1118, %v1114
        %v1351 = vpack.c.b16 %v1119, %v1115
        %v1352 = vpack.c.b16 %v1124, %v1120
        %v1353 = vpack.c.b16 %v1125, %v1121
        %v1354 = vpack.c.b16 %v1126, %v1122
        %v1355 = vpack.c.b16 %v1127, %v1123
        %v1356 = vpack.c.b16 %v1132, %v1128
        %v1357 = vpack.c.b16 %v1133, %v1129
        %v1358 = vpack.c.b16 %v1134, %v1130
        %v1359 = vpack.c.b16 %v1135, %v1131
        %v1360 = vpack.c.b16 %v1140, %v1136
        %v1361 = vpack.c.b16 %v1141, %v1137
        %v1362 = vpack.c.b16 %v1142, %v1138
        %v1363 = vpack.c.b16 %v1143, %v1139
        %v1364 = vpack.c.b16 %v1148, %v1144
        %v1365 = vpack.c.b16 %v1149, %v1145
        %v1366 = vpack.c.b16 %v1150, %v1146
        %v1367 = vpack.c.b16 %v1151, %v1147
        %v1368 = vpack.c.b16 %v1156, %v1152
        %v1369 = vpack.c.b16 %v1157, %v1153
        %v1370 = vpack.c.b16 %v1158, %v1154
        %v1371 = vpack.c.b16 %v1159, %v1155
        %v1372 = vpack.c.b16 %v1164, %v1160
        %v1373 = vpack.c.b16 %v1165, %v1161
        %v1374 = vpack.c.b16 %v1166, %v1162
        %v1375 = vpack.c.b16 %v1167, %v1163
        %v1376 = vpack.c.b16 %v1172, %v1168
        %v1377 = vpack.c.b16 %v1173, %v1169
        %v1378 = vpack.c.b16 %v1174, %v1170
        %v1379 = vpack.c.b16 %v1175, %v1171
        %v1380 = vpack.c.b16 %v1180, %v1176
        %v1381 = vpack.c.b16 %v1181, %v1177
        %v1382 = vpack.c.b16 %v1182, %v1178
        %v1383 = vpack.c.b16 %v1183, %v1179
        %v1384 = vpack.c.b16 %v1188, %v1184
        %v1385 = vpack.c.b16 %v1189, %v1185
        %v1386 = vpack.c.b16 %v1190, %v1186
        %v1387 = vpack.c.b16 %v1191, %v1187
        %vm1584 = vcmask 130048
        %v1586 = vsel %vm1584, %v378, 0
        %v1589 = vsel %vm1584, %v385, 0
        %1591 = vmatprep.subr.bf16.mxu0 %v1193
        %1592 = vmatpush1.bf16.msra.mxu0 %v1192
        %1593 = vmatprep.subr.bf16.mxu0 %v1197
        %1594 = vmatpush1.bf16.msra.mxu0 %v1196
        %1595 = vmatprep.subr.bf16.mxu0 %v1201
        %1596 = vmatpush1.bf16.msra.mxu0 %v1200
        %1597 = vmatprep.subr.bf16.mxu0 %v1205
        %1598 = vmatpush1.bf16.msra.mxu0 %v1204
        %1599 = vmatprep.subr.bf16.mxu0 %v1209
        %1600 = vmatpush1.bf16.msra.mxu0 %v1208
        %1601 = vmatprep.subr.bf16.mxu0 %v1213
        %1602 = vmatpush1.bf16.msra.mxu0 %v1212
        %1603 = vmatprep.subr.bf16.mxu0 %v1217
        %1604 = vmatpush1.bf16.msra.mxu0 %v1216
        %1605 = vmatprep.subr.bf16.mxu0 %v1221
        %1606 = vmatpush1.bf16.msra.mxu0 %v1220
        %1607 = vmatprep.subr.bf16.mxu0 %v1225
        %1608 = vmatpush1.bf16.msra.mxu0 %v1224
        %1609 = vmatprep.subr.bf16.mxu0 %v1229
        %1610 = vmatpush1.bf16.msra.mxu0 %v1228
        %1611 = vmatprep.subr.bf16.mxu0 %v1233
        %1612 = vmatpush1.bf16.msra.mxu0 %v1232
        %1613 = vmatprep.subr.bf16.mxu0 %v1237
        %1614 = vmatpush1.bf16.msra.mxu0 %v1236
        %1615 = vmatprep.subr.bf16.mxu0 %v1241
        %1616 = vmatpush1.bf16.msra.mxu0 %v1240
        %1617 = vmatprep.subr.bf16.mxu0 %v1245
        %1618 = vmatpush1.bf16.msra.mxu0 %v1244
        %1619 = vmatprep.subr.bf16.mxu0 %v1249
        %1620 = vmatpush1.bf16.msra.mxu0 %v1248
        %1621 = vmatprep.subr.bf16.mxu0 %v1253
        %1622 = vmatpush1.bf16.msra.mxu0 %v1252
        %1623 = vmatprep.mubr.bf16.mxu0 %v373
        %1624 = vmatmul.mubr.bf16.gmra.mrb[0].mxu0 %v372
        %v1625 = vpop.f32.mrb[0].mxu0
        %v1626 = vadd.f32 %v587, %v1625
        %v1627 = vpop.f32.mrb[0].mxu0
        %v1628 = vadd.f32 %v591, %v1627
        %v1629 = vpop.f32.mrb[0].mxu0
        %v1630 = vadd.f32 %v587, %v1629
        %v1631 = vpop.f32.mrb[0].mxu0
        %v1632 = vadd.f32 %v591, %v1631
        %1633 = vmatprep.mubr.bf16.mxu0 %v380
        %1634 = vmatmul.mubr.bf16.gmra.mrb[0].mxu0 %v379
        %v1635 = vpop.f32.mrb[0].mxu0
        %v1636 = vadd.f32 %v587, %v1635
        %v1637 = vpop.f32.mrb[0].mxu0
        %v1638 = vadd.f32 %v591, %v1637
        %v1639 = vpop.f32.mrb[0].mxu0
        %v1640 = vadd.f32 %v587, %v1639
        %v1641 = vpop.f32.mrb[0].mxu0
        %v1642 = vadd.f32 %v591, %v1641
        %1643 = vdwg.mxu0
        %1644 = vmatprep.subr.bf16.mxu0 %v1257
        %1645 = vmatpush1.bf16.msra.mxu0 %v1256
        %1646 = vmatprep.subr.bf16.mxu0 %v1261
        %1647 = vmatpush1.bf16.msra.mxu0 %v1260
        %1648 = vmatprep.subr.bf16.mxu0 %v1265
        %1649 = vmatpush1.bf16.msra.mxu0 %v1264
        %1650 = vmatprep.subr.bf16.mxu0 %v1269
        %1651 = vmatpush1.bf16.msra.mxu0 %v1268
        %1652 = vmatprep.subr.bf16.mxu0 %v1273
        %1653 = vmatpush1.bf16.msra.mxu0 %v1272
        %1654 = vmatprep.subr.bf16.mxu0 %v1277
        %1655 = vmatpush1.bf16.msra.mxu0 %v1276
        %1656 = vmatprep.subr.bf16.mxu0 %v1281
        %1657 = vmatpush1.bf16.msra.mxu0 %v1280
        %1658 = vmatprep.subr.bf16.mxu0 %v1285
        %1659 = vmatpush1.bf16.msra.mxu0 %v1284
        %1660 = vmatprep.subr.bf16.mxu0 %v1289
        %1661 = vmatpush1.bf16.msra.mxu0 %v1288
        %1662 = vmatprep.subr.bf16.mxu0 %v1293
        %1663 = vmatpush1.bf16.msra.mxu0 %v1292
        %1664 = vmatprep.subr.bf16.mxu0 %v1297
        %1665 = vmatpush1.bf16.msra.mxu0 %v1296
        %1666 = vmatprep.subr.bf16.mxu0 %v1301
        %1667 = vmatpush1.bf16.msra.mxu0 %v1300
        %1668 = vmatprep.subr.bf16.mxu0 %v1305
        %1669 = vmatpush1.bf16.msra.mxu0 %v1304
        %1670 = vmatprep.subr.bf16.mxu0 %v1309
        %1671 = vmatpush1.bf16.msra.mxu0 %v1308
        %1672 = vmatprep.subr.bf16.mxu0 %v1313
        %1673 = vmatpush1.bf16.msra.mxu0 %v1312
        %1674 = vmatprep.subr.bf16.mxu0 %v1317
        %1675 = vmatpush1.bf16.msra.mxu0 %v1316
        %1676 = vmatprep.mubr.bf16.mxu0 %v375
        %1677 = vmatmul.mubr.bf16.gmra.mrb[0].mxu0 %v374
        %v1678 = vpop.f32.mrb[0].mxu0
        %v1679 = vadd.f32 %v1626, %v1678
        %v1680 = vpop.f32.mrb[0].mxu0
        %v1681 = vadd.f32 %v1628, %v1680
        %v1682 = vpop.f32.mrb[0].mxu0
        %v1683 = vadd.f32 %v1630, %v1682
        %v1684 = vpop.f32.mrb[0].mxu0
        %v1685 = vadd.f32 %v1632, %v1684
        %1686 = vmatprep.mubr.bf16.mxu0 %v382
        %1687 = vmatmul.mubr.bf16.gmra.mrb[0].mxu0 %v381
        %v1688 = vpop.f32.mrb[0].mxu0
        %v1689 = vadd.f32 %v1636, %v1688
        %v1690 = vpop.f32.mrb[0].mxu0
        %v1691 = vadd.f32 %v1638, %v1690
        %v1692 = vpop.f32.mrb[0].mxu0
        %v1693 = vadd.f32 %v1640, %v1692
        %v1694 = vpop.f32.mrb[0].mxu0
        %v1695 = vadd.f32 %v1642, %v1694
        %1696 = vdwg.mxu0
        %1697 = vmatprep.subr.bf16.mxu0 %v1321
        %1698 = vmatpush1.bf16.msra.mxu0 %v1320
        %1699 = vmatprep.subr.bf16.mxu0 %v1325
        %1700 = vmatpush1.bf16.msra.mxu0 %v1324
        %1701 = vmatprep.subr.bf16.mxu0 %v1329
        %1702 = vmatpush1.bf16.msra.mxu0 %v1328
        %1703 = vmatprep.subr.bf16.mxu0 %v1333
        %1704 = vmatpush1.bf16.msra.mxu0 %v1332
        %1705 = vmatprep.subr.bf16.mxu0 %v1337
        %1706 = vmatpush1.bf16.msra.mxu0 %v1336
        %1707 = vmatprep.subr.bf16.mxu0 %v1341
        %1708 = vmatpush1.bf16.msra.mxu0 %v1340
        %1709 = vmatprep.subr.bf16.mxu0 %v1345
        %1710 = vmatpush1.bf16.msra.mxu0 %v1344
        %1711 = vmatprep.subr.bf16.mxu0 %v1349
        %1712 = vmatpush1.bf16.msra.mxu0 %v1348
        %1713 = vmatprep.subr.bf16.mxu0 %v1353
        %1714 = vmatpush1.bf16.msra.mxu0 %v1352
        %1715 = vmatprep.subr.bf16.mxu0 %v1357
        %1716 = vmatpush1.bf16.msra.mxu0 %v1356
        %1717 = vmatprep.subr.bf16.mxu0 %v1361
        %1718 = vmatpush1.bf16.msra.mxu0 %v1360
        %1719 = vmatprep.subr.bf16.mxu0 %v1365
        %1720 = vmatpush1.bf16.msra.mxu0 %v1364
        %1721 = vmatprep.subr.bf16.mxu0 %v1369
        %1722 = vmatpush1.bf16.msra.mxu0 %v1368
        %1723 = vmatprep.subr.bf16.mxu0 %v1373
        %1724 = vmatpush1.bf16.msra.mxu0 %v1372
        %1725 = vmatprep.subr.bf16.mxu0 %v1377
        %1726 = vmatpush1.bf16.msra.mxu0 %v1376
        %1727 = vmatprep.subr.bf16.mxu0 %v1381
        %1728 = vmatpush1.bf16.msra.mxu0 %v1380
        %1729 = vmatprep.mubr.bf16.mxu0 %v377
        %1730 = vmatmul.mubr.bf16.gmra.mrb[0].mxu0 %v376
        %v1731 = vpop.f32.mrb[0].mxu0
        %v1732 = vadd.f32 %v1679, %v1731
        %v1733 = vpop.f32.mrb[0].mxu0
        %v1734 = vadd.f32 %v1681, %v1733
        %v1735 = vpop.f32.mrb[0].mxu0
        %v1736 = vadd.f32 %v1683, %v1735
        %v1737 = vpop.f32.mrb[0].mxu0
        %v1738 = vadd.f32 %v1685, %v1737
        %1739 = vmatprep.mubr.bf16.mxu0 %v384
        %1740 = vmatmul.mubr.bf16.gmra.mrb[0].mxu0 %v383
        %v1741 = vpop.f32.mrb[0].mxu0
        %v1742 = vadd.f32 %v1689, %v1741
        %v1743 = vpop.f32.mrb[0].mxu0
        %v1744 = vadd.f32 %v1691, %v1743
        %v1745 = vpop.f32.mrb[0].mxu0
        %v1746 = vadd.f32 %v1693, %v1745
        %v1747 = vpop.f32.mrb[0].mxu0
        %v1748 = vadd.f32 %v1695, %v1747
        %1749 = vdwg.mxu0
        %1750 = vmatprep.subr.bf16.mxu0 %v1385
        %1751 = vmatpush1.bf16.msra.mxu0 %v1384
        %1752 = vmatprep.subr.bf16.mxu0 0
        %1753 = vmatpush1.bf16.msra.mxu0 0
        %1754 = vmatprep.subr.bf16.mxu0 0
        %1755 = vmatpush1.bf16.msra.mxu0 0
        %1756 = vmatprep.subr.bf16.mxu0 0
        %1757 = vmatpush1.bf16.msra.mxu0 0
        %1758 = vmatprep.subr.bf16.mxu0 0
        %1759 = vmatpush1.bf16.msra.mxu0 0
        %1760 = vmatprep.subr.bf16.mxu0 0
        %1761 = vmatpush1.bf16.msra.mxu0 0
        %1762 = vmatprep.subr.bf16.mxu0 0
        %1763 = vmatpush1.bf16.msra.mxu0 0
        %1764 = vmatprep.subr.bf16.mxu0 0
        %1765 = vmatpush1.bf16.msra.mxu0 0
        %1766 = vmatprep.subr.bf16.mxu0 0
        %1767 = vmatpush1.bf16.msra.mxu0 0
        %1768 = vmatprep.subr.bf16.mxu0 0
        %1769 = vmatpush1.bf16.msra.mxu0 0
        %1770 = vmatprep.subr.bf16.mxu0 0
        %1771 = vmatpush1.bf16.msra.mxu0 0
        %1772 = vmatprep.subr.bf16.mxu0 0
        %1773 = vmatpush1.bf16.msra.mxu0 0
        %1774 = vmatprep.subr.bf16.mxu0 0
        %1775 = vmatpush1.bf16.msra.mxu0 0
        %1776 = vmatprep.subr.bf16.mxu0 0
        %1777 = vmatpush1.bf16.msra.mxu0 0
        %1778 = vmatprep.subr.bf16.mxu0 0
        %1779 = vmatpush1.bf16.msra.mxu0 0
        %1780 = vmatprep.subr.bf16.mxu0 0
        %1781 = vmatpush1.bf16.msra.mxu0 0
        %1782 = vmatprep.mubr.bf16.mxu0 0
        %1783 = vmatmul.mubr.bf16.gmra.mrb[0].mxu0 %v1586
        %v1784 = vpop.f32.mrb[0].mxu0
        %v1785 = vadd.f32 %v1732, %v1784
        %v1786 = vpop.f32.mrb[0].mxu0
        %v1787 = vadd.f32 %v1734, %v1786
        %v1788 = vpop.f32.mrb[0].mxu0
        %v1789 = vadd.f32 %v1736, %v1788
        %v1790 = vpop.f32.mrb[0].mxu0
        %v1791 = vadd.f32 %v1738, %v1790
        %1792 = vmatprep.mubr.bf16.mxu0 0
        %1793 = vmatmul.mubr.bf16.gmra.mrb[0].mxu0 %v1589
        %v1794 = vpop.f32.mrb[0].mxu0
        %v1795 = vadd.f32 %v1742, %v1794
        %v1796 = vpop.f32.mrb[0].mxu0
        %v1797 = vadd.f32 %v1744, %v1796
        %v1798 = vpop.f32.mrb[0].mxu0
        %v1799 = vadd.f32 %v1746, %v1798
        %v1800 = vpop.f32.mrb[0].mxu0
        %v1801 = vadd.f32 %v1748, %v1800
        %1802 = vdwg.mxu0
        %1803 = vmatprep.subr.bf16.mxu0 %v1195
        %1804 = vmatpush1.bf16.msra.mxu0 %v1194
        %1805 = vmatprep.subr.bf16.mxu0 %v1199
        %1806 = vmatpush1.bf16.msra.mxu0 %v1198
        %1807 = vmatprep.subr.bf16.mxu0 %v1203
        %1808 = vmatpush1.bf16.msra.mxu0 %v1202
        %1809 = vmatprep.subr.bf16.mxu0 %v1207
        %1810 = vmatpush1.bf16.msra.mxu0 %v1206
        %1811 = vmatprep.subr.bf16.mxu0 %v1211
        %1812 = vmatpush1.bf16.msra.mxu0 %v1210
        %1813 = vmatprep.subr.bf16.mxu0 %v1215
        %1814 = vmatpush1.bf16.msra.mxu0 %v1214
        %1815 = vmatprep.subr.bf16.mxu0 %v1219
        %1816 = vmatpush1.bf16.msra.mxu0 %v1218
        %1817 = vmatprep.subr.bf16.mxu0 %v1223
        %1818 = vmatpush1.bf16.msra.mxu0 %v1222
        %1819 = vmatprep.subr.bf16.mxu0 %v1227
        %1820 = vmatpush1.bf16.msra.mxu0 %v1226
        %1821 = vmatprep.subr.bf16.mxu0 %v1231
        %1822 = vmatpush1.bf16.msra.mxu0 %v1230
        %1823 = vmatprep.subr.bf16.mxu0 %v1235
        %1824 = vmatpush1.bf16.msra.mxu0 %v1234
        %1825 = vmatprep.subr.bf16.mxu0 %v1239
        %1826 = vmatpush1.bf16.msra.mxu0 %v1238
        %1827 = vmatprep.subr.bf16.mxu0 %v1243
        %1828 = vmatpush1.bf16.msra.mxu0 %v1242
        %1829 = vmatprep.subr.bf16.mxu0 %v1247
        %1830 = vmatpush1.bf16.msra.mxu0 %v1246
        %1831 = vmatprep.subr.bf16.mxu0 %v1251
        %1832 = vmatpush1.bf16.msra.mxu0 %v1250
        %1833 = vmatprep.subr.bf16.mxu0 %v1255
        %1834 = vmatpush1.bf16.msra.mxu0 %v1254
        %1835 = vmatprep.mubr.bf16.mxu0 %v373
        %1836 = vmatmul.mubr.bf16.gmra.mrb[0].mxu0 %v372
        %v1837 = vpop.f32.mrb[0].mxu0
        %v1838 = vadd.f32 %v595, %v1837
        %v1839 = vpop.f32.mrb[0].mxu0
        %v1840 = vadd.f32 %v599, %v1839
        %v1841 = vpop.f32.mrb[0].mxu0
        %v1842 = vadd.f32 %v595, %v1841
        %v1843 = vpop.f32.mrb[0].mxu0
        %v1844 = vadd.f32 %v599, %v1843
        %1845 = vmatprep.mubr.bf16.mxu0 %v380
        %1846 = vmatmul.mubr.bf16.gmra.mrb[0].mxu0 %v379
        %v1847 = vpop.f32.mrb[0].mxu0
        %v1848 = vadd.f32 %v595, %v1847
        %v1849 = vpop.f32.mrb[0].mxu0
        %v1850 = vadd.f32 %v599, %v1849
        %v1851 = vpop.f32.mrb[0].mxu0
        %v1852 = vadd.f32 %v595, %v1851
        %v1853 = vpop.f32.mrb[0].mxu0
        %v1854 = vadd.f32 %v599, %v1853
        %1855 = vdwg.mxu0
        %1856 = vmatprep.subr.bf16.mxu0 %v1259
        %1857 = vmatpush1.bf16.msra.mxu0 %v1258
        %1858 = vmatprep.subr.bf16.mxu0 %v1263
        %1859 = vmatpush1.bf16.msra.mxu0 %v1262
        %1860 = vmatprep.subr.bf16.mxu0 %v1267
        %1861 = vmatpush1.bf16.msra.mxu0 %v1266
        %1862 = vmatprep.subr.bf16.mxu0 %v1271
        %1863 = vmatpush1.bf16.msra.mxu0 %v1270
        %1864 = vmatprep.subr.bf16.mxu0 %v1275
        %1865 = vmatpush1.bf16.msra.mxu0 %v1274
        %1866 = vmatprep.subr.bf16.mxu0 %v1279
        %1867 = vmatpush1.bf16.msra.mxu0 %v1278
        %1868 = vmatprep.subr.bf16.mxu0 %v1283
        %1869 = vmatpush1.bf16.msra.mxu0 %v1282
        %1870 = vmatprep.subr.bf16.mxu0 %v1287
        %1871 = vmatpush1.bf16.msra.mxu0 %v1286
        %1872 = vmatprep.subr.bf16.mxu0 %v1291
        %1873 = vmatpush1.bf16.msra.mxu0 %v1290
        %1874 = vmatprep.subr.bf16.mxu0 %v1295
        %1875 = vmatpush1.bf16.msra.mxu0 %v1294
        %1876 = vmatprep.subr.bf16.mxu0 %v1299
        %1877 = vmatpush1.bf16.msra.mxu0 %v1298
        %1878 = vmatprep.subr.bf16.mxu0 %v1303
        %1879 = vmatpush1.bf16.msra.mxu0 %v1302
        %1880 = vmatprep.subr.bf16.mxu0 %v1307
        %1881 = vmatpush1.bf16.msra.mxu0 %v1306
        %1882 = vmatprep.subr.bf16.mxu0 %v1311
        %1883 = vmatpush1.bf16.msra.mxu0 %v1310
        %1884 = vmatprep.subr.bf16.mxu0 %v1315
        %1885 = vmatpush1.bf16.msra.mxu0 %v1314
        %1886 = vmatprep.subr.bf16.mxu0 %v1319
        %1887 = vmatpush1.bf16.msra.mxu0 %v1318
        %1888 = vmatprep.mubr.bf16.mxu0 %v375
        %1889 = vmatmul.mubr.bf16.gmra.mrb[0].mxu0 %v374
        %v1890 = vpop.f32.mrb[0].mxu0
        %v1891 = vadd.f32 %v1838, %v1890
        %v1892 = vpop.f32.mrb[0].mxu0
        %v1893 = vadd.f32 %v1840, %v1892
        %v1894 = vpop.f32.mrb[0].mxu0
        %v1895 = vadd.f32 %v1842, %v1894
        %v1896 = vpop.f32.mrb[0].mxu0
        %v1897 = vadd.f32 %v1844, %v1896
        %1898 = vmatprep.mubr.bf16.mxu0 %v382
        %1899 = vmatmul.mubr.bf16.gmra.mrb[0].mxu0 %v381
        %v1900 = vpop.f32.mrb[0].mxu0
        %v1901 = vadd.f32 %v1848, %v1900
        %v1902 = vpop.f32.mrb[0].mxu0
        %v1903 = vadd.f32 %v1850, %v1902
        %v1904 = vpop.f32.mrb[0].mxu0
        %v1905 = vadd.f32 %v1852, %v1904
        %v1906 = vpop.f32.mrb[0].mxu0
        %v1907 = vadd.f32 %v1854, %v1906
        %1908 = vdwg.mxu0
        %1909 = vmatprep.subr.bf16.mxu0 %v1323
        %1910 = vmatpush1.bf16.msra.mxu0 %v1322
        %1911 = vmatprep.subr.bf16.mxu0 %v1327
        %1912 = vmatpush1.bf16.msra.mxu0 %v1326
        %1913 = vmatprep.subr.bf16.mxu0 %v1331
        %1914 = vmatpush1.bf16.msra.mxu0 %v1330
        %1915 = vmatprep.subr.bf16.mxu0 %v1335
        %1916 = vmatpush1.bf16.msra.mxu0 %v1334
        %1917 = vmatprep.subr.bf16.mxu0 %v1339
        %1918 = vmatpush1.bf16.msra.mxu0 %v1338
        %1919 = vmatprep.subr.bf16.mxu0 %v1343
        %1920 = vmatpush1.bf16.msra.mxu0 %v1342
        %1921 = vmatprep.subr.bf16.mxu0 %v1347
        %1922 = vmatpush1.bf16.msra.mxu0 %v1346
        %1923 = vmatprep.subr.bf16.mxu0 %v1351
        %1924 = vmatpush1.bf16.msra.mxu0 %v1350
        %1925 = vmatprep.subr.bf16.mxu0 %v1355
        %1926 = vmatpush1.bf16.msra.mxu0 %v1354
        %1927 = vmatprep.subr.bf16.mxu0 %v1359
        %1928 = vmatpush1.bf16.msra.mxu0 %v1358
        %1929 = vmatprep.subr.bf16.mxu0 %v1363
        %1930 = vmatpush1.bf16.msra.mxu0 %v1362
        %1931 = vmatprep.subr.bf16.mxu0 %v1367
        %1932 = vmatpush1.bf16.msra.mxu0 %v1366
        %1933 = vmatprep.subr.bf16.mxu0 %v1371
        %1934 = vmatpush1.bf16.msra.mxu0 %v1370
        %1935 = vmatprep.subr.bf16.mxu0 %v1375
        %1936 = vmatpush1.bf16.msra.mxu0 %v1374
        %1937 = vmatprep.subr.bf16.mxu0 %v1379
        %1938 = vmatpush1.bf16.msra.mxu0 %v1378
        %1939 = vmatprep.subr.bf16.mxu0 %v1383
        %1940 = vmatpush1.bf16.msra.mxu0 %v1382
        %1941 = vmatprep.mubr.bf16.mxu0 %v377
        %1942 = vmatmul.mubr.bf16.gmra.mrb[0].mxu0 %v376
        %v1943 = vpop.f32.mrb[0].mxu0
        %v1944 = vadd.f32 %v1891, %v1943
        %v1945 = vpop.f32.mrb[0].mxu0
        %v1946 = vadd.f32 %v1893, %v1945
        %v1947 = vpop.f32.mrb[0].mxu0
        %v1948 = vadd.f32 %v1895, %v1947
        %v1949 = vpop.f32.mrb[0].mxu0
        %v1950 = vadd.f32 %v1897, %v1949
        %1951 = vmatprep.mubr.bf16.mxu0 %v384
        %1952 = vmatmul.mubr.bf16.gmra.mrb[0].mxu0 %v383
        %v1953 = vpop.f32.mrb[0].mxu0
        %v1954 = vadd.f32 %v1901, %v1953
        %v1955 = vpop.f32.mrb[0].mxu0
        %v1956 = vadd.f32 %v1903, %v1955
        %v1957 = vpop.f32.mrb[0].mxu0
        %v1958 = vadd.f32 %v1905, %v1957
        %v1959 = vpop.f32.mrb[0].mxu0
        %v1960 = vadd.f32 %v1907, %v1959
        %1961 = vdwg.mxu0
        %1962 = vmatprep.subr.bf16.mxu0 %v1387
        %1963 = vmatpush1.bf16.msra.mxu0 %v1386
        %1964 = vmatprep.subr.bf16.mxu0 0
        %1965 = vmatpush1.bf16.msra.mxu0 0
        %1966 = vmatprep.subr.bf16.mxu0 0
        %1967 = vmatpush1.bf16.msra.mxu0 0
        %1968 = vmatprep.subr.bf16.mxu0 0
        %1969 = vmatpush1.bf16.msra.mxu0 0
        %1970 = vmatprep.subr.bf16.mxu0 0
        %1971 = vmatpush1.bf16.msra.mxu0 0
        %1972 = vmatprep.subr.bf16.mxu0 0
        %1973 = vmatpush1.bf16.msra.mxu0 0
        %1974 = vmatprep.subr.bf16.mxu0 0
        %1975 = vmatpush1.bf16.msra.mxu0 0
        %1976 = vmatprep.subr.bf16.mxu0 0
        %1977 = vmatpush1.bf16.msra.mxu0 0
        %1978 = vmatprep.subr.bf16.mxu0 0
        %1979 = vmatpush1.bf16.msra.mxu0 0
        %1980 = vmatprep.subr.bf16.mxu0 0
        %1981 = vmatpush1.bf16.msra.mxu0 0
        %1982 = vmatprep.subr.bf16.mxu0 0
        %1983 = vmatpush1.bf16.msra.mxu0 0
        %1984 = vmatprep.subr.bf16.mxu0 0
        %1985 = vmatpush1.bf16.msra.mxu0 0
        %1986 = vmatprep.subr.bf16.mxu0 0
        %1987 = vmatpush1.bf16.msra.mxu0 0
        %1988 = vmatprep.subr.bf16.mxu0 0
        %1989 = vmatpush1.bf16.msra.mxu0 0
        %1990 = vmatprep.subr.bf16.mxu0 0
        %1991 = vmatpush1.bf16.msra.mxu0 0
        %1992 = vmatprep.subr.bf16.mxu0 0
        %1993 = vmatpush1.bf16.msra.mxu0 0
        %1994 = vmatprep.mubr.bf16.mxu0 0
        %1995 = vmatmul.mubr.bf16.gmra.mrb[0].mxu0 %v1586
        %v1996 = vpop.f32.mrb[0].mxu0
        %v1997 = vadd.f32 %v1944, %v1996
        %v1998 = vpop.f32.mrb[0].mxu0
        %v1999 = vadd.f32 %v1946, %v1998
        %v2000 = vpop.f32.mrb[0].mxu0
        %v2001 = vadd.f32 %v1948, %v2000
        %v2002 = vpop.f32.mrb[0].mxu0
        %v2003 = vadd.f32 %v1950, %v2002
        %2004 = vmatprep.mubr.bf16.mxu0 0
        %2005 = vmatmul.mubr.bf16.gmra.mrb[0].mxu0 %v1589
        %v2006 = vpop.f32.mrb[0].mxu0
        %v2007 = vadd.f32 %v1954, %v2006
        %v2008 = vpop.f32.mrb[0].mxu0
        %v2009 = vadd.f32 %v1956, %v2008
        %v2010 = vpop.f32.mrb[0].mxu0
        %v2011 = vadd.f32 %v1958, %v2010
        %v2012 = vpop.f32.mrb[0].mxu0
        %v2013 = vadd.f32 %v1960, %v2012
        %2014 = vdwg.mxu0
        %v2015 = vmul.f32 %v1785, 0.2
        %v2016 = vmul.f32 %v1787, 0.2
        %v2017 = vmul.f32 %v1997, 0.2
        %v2018 = vmul.f32 %v1999, 0.2
        %v2019 = vmul.f32 %v1789, 0.2
        %v2020 = vmul.f32 %v1791, 0.2
        %v2021 = vmul.f32 %v2001, 0.2
        %v2022 = vmul.f32 %v2003, 0.2
        %v2023 = vmul.f32 %v1795, 0.2
        %v2024 = vmul.f32 %v1797, 0.2
        %v2025 = vmul.f32 %v2007, 0.2
        %v2026 = vmul.f32 %v2009, 0.2
        %v2027 = vmul.f32 %v1799, 0.2
        %v2028 = vmul.f32 %v1801, 0.2
        %v2029 = vmul.f32 %v2011, 0.2
        %v2030 = vmul.f32 %v2013, 0.2
        %v2031 = vmax.f32 %v1785, %v2015
        %v2032 = vmax.f32 %v1787, %v2016
        %v2033 = vmax.f32 %v1997, %v2017
        %v2034 = vmax.f32 %v1999, %v2018
        %v2035 = vmax.f32 %v1789, %v2019
        %v2036 = vmax.f32 %v1791, %v2020
        %v2037 = vmax.f32 %v2001, %v2021
        %v2038 = vmax.f32 %v2003, %v2022
        %v2039 = vmax.f32 %v1795, %v2023
        %v2040 = vmax.f32 %v1797, %v2024
        %v2041 = vmax.f32 %v2007, %v2025
        %v2042 = vmax.f32 %v2009, %v2026
        %v2043 = vmax.f32 %v1799, %v2027
        %v2044 = vmax.f32 %v1801, %v2028
        %v2045 = vmax.f32 %v2011, %v2029
        %v2046 = vmax.f32 %v2013, %v2030
        %v2047 = vpack.c.bf16 %v2035, %v2031
        %v2048 = vpack.c.bf16 %v2036, %v2032
        %v2049 = vpack.c.bf16 %v2037, %v2033
        %v2050 = vpack.c.bf16 %v2038, %v2034
        %v2051 = vpack.c.bf16 %v2043, %v2039
        %v2052 = vpack.c.bf16 %v2044, %v2040
        %v2053 = vpack.c.bf16 %v2045, %v2041
        %v2054 = vpack.c.bf16 %v2046, %v2042
        %v2055 = vld [vmem:[#allocation7] sm:$0xff]
        %v2056 = vld [vmem:[#allocation7 + $0x8] sm:$0xff]
        %v2057 = vld [vmem:[#allocation7 + $0x10] sm:$0xff]
        %v2058 = vld [vmem:[#allocation7 + $0x18] sm:$0xff]
        %v2059 = vld [vmem:[#allocation7 + $0x20] sm:$0xff]
        %v2060 = vld [vmem:[#allocation7 + $0x28] sm:$0xff]
        %v2061 = vld [vmem:[#allocation7 + $0x30] sm:$0xff]
        %v2062 = vld [vmem:[#allocation7 + $0x38] sm:$0xff]
        %v2063 = vld [vmem:[#allocation7 + $0x40] sm:$0xff]
        %v2064 = vld [vmem:[#allocation7 + $0x48] sm:$0xff]
        %v2065 = vld [vmem:[#allocation7 + $0x50] sm:$0xff]
        %v2066 = vld [vmem:[#allocation7 + $0x58] sm:$0xff]
        %v2067 = vld [vmem:[#allocation7 + $0x60] sm:$0xff]
        %v2068 = vld [vmem:[#allocation7 + $0x68] sm:$0xff]
        %v2069 = vld [vmem:[#allocation7 + $0x70] sm:$0xff]
        %v2070 = vld [vmem:[#allocation7 + $0x78] sm:$0xff]
        %v2071 = vld [vmem:[#allocation7 + $0x80] sm:$0xff]
        %v2072 = vld [vmem:[#allocation7 + $0x88] sm:$0xff]
        %v2073 = vld [vmem:[#allocation7 + $0x90] sm:$0xff]
        %v2074 = vld [vmem:[#allocation7 + $0x98] sm:$0xff]
        %v2075 = vld [vmem:[#allocation7 + $0xa0] sm:$0xff]
        %v2076 = vld [vmem:[#allocation7 + $0xa8] sm:$0xff]
        %v2077 = vld [vmem:[#allocation7 + $0xb0] sm:$0xff]
        %v2078 = vld [vmem:[#allocation7 + $0xb8] sm:$0xff]
        %v2079 = vld [vmem:[#allocation7 + $0xc0] sm:$0xff]
        %v2080 = vld [vmem:[#allocation7 + $0xc8] sm:$0xff]
        %v2081 = vld [vmem:[#allocation7 + $0xd0] sm:$0xff]
        %v2082 = vld [vmem:[#allocation7 + $0xd8] sm:$0xff]
        %v2083 = vld [vmem:[#allocation7 + $0xe0] sm:$0xff]
        %v2084 = vld [vmem:[#allocation7 + $0xe8] sm:$0xff]
        %v2085 = vld [vmem:[#allocation7 + $0xf0] sm:$0xff]
        %v2086 = vld [vmem:[#allocation7 + $0xf8] sm:$0xff]
        %v2087 = vld [vmem:[#allocation7 + $0x100] sm:$0xff]
        %v2088 = vld [vmem:[#allocation7 + $0x108] sm:$0xff]
        %v2089 = vld [vmem:[#allocation7 + $0x110] sm:$0xff]
        %v2090 = vld [vmem:[#allocation7 + $0x118] sm:$0xff]
        %v2091 = vld [vmem:[#allocation7 + $0x120] sm:$0xff]
        %v2092 = vld [vmem:[#allocation7 + $0x128] sm:$0xff]
        %v2093 = vld [vmem:[#allocation7 + $0x130] sm:$0xff]
        %v2094 = vld [vmem:[#allocation7 + $0x138] sm:$0xff]
        %v2095 = vld [vmem:[#allocation7 + $0x140] sm:$0xff]
        %v2096 = vld [vmem:[#allocation7 + $0x148] sm:$0xff]
        %v2097 = vld [vmem:[#allocation7 + $0x150] sm:$0xff]
        %v2098 = vld [vmem:[#allocation7 + $0x158] sm:$0xff]
        %v2099 = vld [vmem:[#allocation7 + $0x160] sm:$0xff]
        %v2100 = vld [vmem:[#allocation7 + $0x168] sm:$0xff]
        %v2101 = vld [vmem:[#allocation7 + $0x170] sm:$0xff]
        %v2102 = vld [vmem:[#allocation7 + $0x178] sm:$0xff]
        %v2103 = vld [vmem:[#allocation7 + $0x180] sm:$0xff]
        %v2104 = vld [vmem:[#allocation7 + $0x188] sm:$0xff]
        %v2105 = vld [vmem:[#allocation7 + $0x190] sm:$0xff]
        %v2106 = vld [vmem:[#allocation7 + $0x198] sm:$0xff]
        %v2107 = vld [vmem:[#allocation7 + $0x1a0] sm:$0xff]
        %v2108 = vld [vmem:[#allocation7 + $0x1a8] sm:$0xff]
        %v2109 = vld [vmem:[#allocation7 + $0x1b0] sm:$0xff]
        %v2110 = vld [vmem:[#allocation7 + $0x1b8] sm:$0xff]
        %v2111 = vld [vmem:[#allocation7 + $0x1c0] sm:$0xff]
        %v2112 = vld [vmem:[#allocation7 + $0x1c8] sm:$0xff]
        %v2113 = vld [vmem:[#allocation7 + $0x1d0] sm:$0xff]
        %v2114 = vld [vmem:[#allocation7 + $0x1d8] sm:$0xff]
        %v2115 = vld [vmem:[#allocation7 + $0x1e0] sm:$0xff]
        %v2116 = vld [vmem:[#allocation7 + $0x1e8] sm:$0xff]
        %v2117 = vld [vmem:[#allocation7 + $0x1f0] sm:$0xff]
        %v2118 = vld [vmem:[#allocation7 + $0x1f8] sm:$0xff]
        %v2119 = vld [vmem:[%s4] sm:$0x3]
        %v2121 = vlaneseq
        %v2122 = vshrl.u32 %v2121, 7
        %v2123 = vsub.s32 0, %v2122
        %v2124 = vrot.slane %v2119, %v2123
        %v2125 = vlaneseq
        %v2126 = vshrl.u32 %v2125, 7
        %v2127 = vsub.s32 1, %v2126
        %v2128 = vrot.slane %v2119, %v2127
        %v2195 = vunpack.c.l.b16 %v2055
        %v2196 = vunpack.c.h.b16 %v2055
        %v2197 = vunpack.c.l.b16 %v2056
        %v2198 = vunpack.c.h.b16 %v2056
        %v2199 = vunpack.c.l.b16 %v2057
        %v2200 = vunpack.c.h.b16 %v2057
        %v2201 = vunpack.c.l.b16 %v2058
        %v2202 = vunpack.c.h.b16 %v2058
        %v2203 = vunpack.c.l.b16 %v2059
        %v2204 = vunpack.c.h.b16 %v2059
        %v2205 = vunpack.c.l.b16 %v2060
        %v2206 = vunpack.c.h.b16 %v2060
        %v2207 = vunpack.c.l.b16 %v2061
        %v2208 = vunpack.c.h.b16 %v2061
        %v2209 = vunpack.c.l.b16 %v2062
        %v2210 = vunpack.c.h.b16 %v2062
        %v2211 = vunpack.c.l.b16 %v2063
        %v2212 = vunpack.c.h.b16 %v2063
        %v2213 = vunpack.c.l.b16 %v2064
        %v2214 = vunpack.c.h.b16 %v2064
        %v2215 = vunpack.c.l.b16 %v2065
        %v2216 = vunpack.c.h.b16 %v2065
        %v2217 = vunpack.c.l.b16 %v2066
        %v2218 = vunpack.c.h.b16 %v2066
        %v2219 = vunpack.c.l.b16 %v2067
        %v2220 = vunpack.c.h.b16 %v2067
        %v2221 = vunpack.c.l.b16 %v2068
        %v2222 = vunpack.c.h.b16 %v2068
        %v2223 = vunpack.c.l.b16 %v2069
        %v2224 = vunpack.c.h.b16 %v2069
        %v2225 = vunpack.c.l.b16 %v2070
        %v2226 = vunpack.c.h.b16 %v2070
        %v2227 = vunpack.c.l.b16 %v2071
        %v2228 = vunpack.c.h.b16 %v2071
        %v2229 = vunpack.c.l.b16 %v2072
        %v2230 = vunpack.c.h.b16 %v2072
        %v2231 = vunpack.c.l.b16 %v2073
        %v2232 = vunpack.c.h.b16 %v2073
        %v2233 = vunpack.c.l.b16 %v2074
        %v2234 = vunpack.c.h.b16 %v2074
        %v2235 = vunpack.c.l.b16 %v2075
        %v2236 = vunpack.c.h.b16 %v2075
        %v2237 = vunpack.c.l.b16 %v2076
        %v2238 = vunpack.c.h.b16 %v2076
        %v2239 = vunpack.c.l.b16 %v2077
        %v2240 = vunpack.c.h.b16 %v2077
        %v2241 = vunpack.c.l.b16 %v2078
        %v2242 = vunpack.c.h.b16 %v2078
        %v2243 = vunpack.c.l.b16 %v2079
        %v2244 = vunpack.c.h.b16 %v2079
        %v2245 = vunpack.c.l.b16 %v2080
        %v2246 = vunpack.c.h.b16 %v2080
        %v2247 = vunpack.c.l.b16 %v2081
        %v2248 = vunpack.c.h.b16 %v2081
        %v2249 = vunpack.c.l.b16 %v2082
        %v2250 = vunpack.c.h.b16 %v2082
        %v2251 = vunpack.c.l.b16 %v2083
        %v2252 = vunpack.c.h.b16 %v2083
        %v2253 = vunpack.c.l.b16 %v2084
        %v2254 = vunpack.c.h.b16 %v2084
        %v2255 = vunpack.c.l.b16 %v2085
        %v2256 = vunpack.c.h.b16 %v2085
        %v2257 = vunpack.c.l.b16 %v2086
        %v2258 = vunpack.c.h.b16 %v2086
        %v2259 = vunpack.c.l.b16 %v2087
        %v2260 = vunpack.c.h.b16 %v2087
        %v2261 = vunpack.c.l.b16 %v2088
        %v2262 = vunpack.c.h.b16 %v2088
        %v2263 = vunpack.c.l.b16 %v2089
        %v2264 = vunpack.c.h.b16 %v2089
        %v2265 = vunpack.c.l.b16 %v2090
        %v2266 = vunpack.c.h.b16 %v2090
        %v2267 = vunpack.c.l.b16 %v2091
        %v2268 = vunpack.c.h.b16 %v2091
        %v2269 = vunpack.c.l.b16 %v2092
        %v2270 = vunpack.c.h.b16 %v2092
        %v2271 = vunpack.c.l.b16 %v2093
        %v2272 = vunpack.c.h.b16 %v2093
        %v2273 = vunpack.c.l.b16 %v2094
        %v2274 = vunpack.c.h.b16 %v2094
        %v2275 = vunpack.c.l.b16 %v2095
        %v2276 = vunpack.c.h.b16 %v2095
        %v2277 = vunpack.c.l.b16 %v2096
        %v2278 = vunpack.c.h.b16 %v2096
        %v2279 = vunpack.c.l.b16 %v2097
        %v2280 = vunpack.c.h.b16 %v2097
        %v2281 = vunpack.c.l.b16 %v2098
        %v2282 = vunpack.c.h.b16 %v2098
        %v2283 = vunpack.c.l.b16 %v2099
        %v2284 = vunpack.c.h.b16 %v2099
        %v2285 = vunpack.c.l.b16 %v2100
        %v2286 = vunpack.c.h.b16 %v2100
        %v2287 = vunpack.c.l.b16 %v2101
        %v2288 = vunpack.c.h.b16 %v2101
        %v2289 = vunpack.c.l.b16 %v2102
        %v2290 = vunpack.c.h.b16 %v2102
        %v2291 = vunpack.c.l.b16 %v2103
        %v2292 = vunpack.c.h.b16 %v2103
        %v2293 = vunpack.c.l.b16 %v2104
        %v2294 = vunpack.c.h.b16 %v2104
        %v2295 = vunpack.c.l.b16 %v2105
        %v2296 = vunpack.c.h.b16 %v2105
        %v2297 = vunpack.c.l.b16 %v2106
        %v2298 = vunpack.c.h.b16 %v2106
        %v2299 = vunpack.c.l.b16 %v2107
        %v2300 = vunpack.c.h.b16 %v2107
        %v2301 = vunpack.c.l.b16 %v2108
        %v2302 = vunpack.c.h.b16 %v2108
        %v2303 = vunpack.c.l.b16 %v2109
        %v2304 = vunpack.c.h.b16 %v2109
        %v2305 = vunpack.c.l.b16 %v2110
        %v2306 = vunpack.c.h.b16 %v2110
        %v2307 = vunpack.c.l.b16 %v2111
        %v2308 = vunpack.c.h.b16 %v2111
        %v2309 = vunpack.c.l.b16 %v2112
        %v2310 = vunpack.c.h.b16 %v2112
        %v2311 = vunpack.c.l.b16 %v2113
        %v2312 = vunpack.c.h.b16 %v2113
        %v2313 = vunpack.c.l.b16 %v2114
        %v2314 = vunpack.c.h.b16 %v2114
        %v2315 = vunpack.c.l.b16 %v2115
        %v2316 = vunpack.c.h.b16 %v2115
        %v2317 = vunpack.c.l.b16 %v2116
        %v2318 = vunpack.c.h.b16 %v2116
        %v2319 = vunpack.c.l.b16 %v2117
        %v2320 = vunpack.c.h.b16 %v2117
        %v2321 = vunpack.c.l.b16 %v2118
        %v2322 = vunpack.c.h.b16 %v2118
        %v2323 = vpack.c.b16 %v2197, %v2195
        %v2324 = vpack.c.b16 %v2198, %v2196
        %v2325 = vpack.c.b16 %v2201, %v2199
        %v2326 = vpack.c.b16 %v2202, %v2200
        %v2327 = vpack.c.b16 %v2205, %v2203
        %v2328 = vpack.c.b16 %v2206, %v2204
        %v2329 = vpack.c.b16 %v2209, %v2207
        %v2330 = vpack.c.b16 %v2210, %v2208
        %v2331 = vpack.c.b16 %v2213, %v2211
        %v2332 = vpack.c.b16 %v2214, %v2212
        %v2333 = vpack.c.b16 %v2217, %v2215
        %v2334 = vpack.c.b16 %v2218, %v2216
        %v2335 = vpack.c.b16 %v2221, %v2219
        %v2336 = vpack.c.b16 %v2222, %v2220
        %v2337 = vpack.c.b16 %v2225, %v2223
        %v2338 = vpack.c.b16 %v2226, %v2224
        %v2339 = vpack.c.b16 %v2229, %v2227
        %v2340 = vpack.c.b16 %v2230, %v2228
        %v2341 = vpack.c.b16 %v2233, %v2231
        %v2342 = vpack.c.b16 %v2234, %v2232
        %v2343 = vpack.c.b16 %v2237, %v2235
        %v2344 = vpack.c.b16 %v2238, %v2236
        %v2345 = vpack.c.b16 %v2241, %v2239
        %v2346 = vpack.c.b16 %v2242, %v2240
        %v2347 = vpack.c.b16 %v2245, %v2243
        %v2348 = vpack.c.b16 %v2246, %v2244
        %v2349 = vpack.c.b16 %v2249, %v2247
        %v2350 = vpack.c.b16 %v2250, %v2248
        %v2351 = vpack.c.b16 %v2253, %v2251
        %v2352 = vpack.c.b16 %v2254, %v2252
        %v2353 = vpack.c.b16 %v2257, %v2255
        %v2354 = vpack.c.b16 %v2258, %v2256
        %v2355 = vpack.c.b16 %v2261, %v2259
        %v2356 = vpack.c.b16 %v2262, %v2260
        %v2357 = vpack.c.b16 %v2265, %v2263
        %v2358 = vpack.c.b16 %v2266, %v2264
        %v2359 = vpack.c.b16 %v2269, %v2267
        %v2360 = vpack.c.b16 %v2270, %v2268
        %v2361 = vpack.c.b16 %v2273, %v2271
        %v2362 = vpack.c.b16 %v2274, %v2272
        %v2363 = vpack.c.b16 %v2277, %v2275
        %v2364 = vpack.c.b16 %v2278, %v2276
        %v2365 = vpack.c.b16 %v2281, %v2279
        %v2366 = vpack.c.b16 %v2282, %v2280
        %v2367 = vpack.c.b16 %v2285, %v2283
        %v2368 = vpack.c.b16 %v2286, %v2284
        %v2369 = vpack.c.b16 %v2289, %v2287
        %v2370 = vpack.c.b16 %v2290, %v2288
        %v2371 = vpack.c.b16 %v2293, %v2291
        %v2372 = vpack.c.b16 %v2294, %v2292
        %v2373 = vpack.c.b16 %v2297, %v2295
        %v2374 = vpack.c.b16 %v2298, %v2296
        %v2375 = vpack.c.b16 %v2301, %v2299
        %v2376 = vpack.c.b16 %v2302, %v2300
        %v2377 = vpack.c.b16 %v2305, %v2303
        %v2378 = vpack.c.b16 %v2306, %v2304
        %v2379 = vpack.c.b16 %v2309, %v2307
        %v2380 = vpack.c.b16 %v2310, %v2308
        %v2381 = vpack.c.b16 %v2313, %v2311
        %v2382 = vpack.c.b16 %v2314, %v2312
        %v2383 = vpack.c.b16 %v2317, %v2315
        %v2384 = vpack.c.b16 %v2318, %v2316
        %v2385 = vpack.c.b16 %v2321, %v2319
        %v2386 = vpack.c.b16 %v2322, %v2320
        %2451 = vmatprep.subr.bf16.mxu0 %v2324
        %2452 = vmatpush1.bf16.msra.mxu0 %v2323
        %2453 = vmatprep.subr.bf16.mxu0 %v2326
        %2454 = vmatpush1.bf16.msra.mxu0 %v2325
        %2455 = vmatprep.subr.bf16.mxu0 %v2328
        %2456 = vmatpush1.bf16.msra.mxu0 %v2327
        %2457 = vmatprep.subr.bf16.mxu0 %v2330
        %2458 = vmatpush1.bf16.msra.mxu0 %v2329
        %2459 = vmatprep.subr.bf16.mxu0 %v2332
        %2460 = vmatpush1.bf16.msra.mxu0 %v2331
        %2461 = vmatprep.subr.bf16.mxu0 %v2334
        %2462 = vmatpush1.bf16.msra.mxu0 %v2333
        %2463 = vmatprep.subr.bf16.mxu0 %v2336
        %2464 = vmatpush1.bf16.msra.mxu0 %v2335
        %2465 = vmatprep.subr.bf16.mxu0 %v2338
        %2466 = vmatpush1.bf16.msra.mxu0 %v2337
        %2467 = vmatprep.subr.bf16.mxu0 %v2340
        %2468 = vmatpush1.bf16.msra.mxu0 %v2339
        %2469 = vmatprep.subr.bf16.mxu0 %v2342
        %2470 = vmatpush1.bf16.msra.mxu0 %v2341
        %2471 = vmatprep.subr.bf16.mxu0 %v2344
        %2472 = vmatpush1.bf16.msra.mxu0 %v2343
        %2473 = vmatprep.subr.bf16.mxu0 %v2346
        %2474 = vmatpush1.bf16.msra.mxu0 %v2345
        %2475 = vmatprep.subr.bf16.mxu0 %v2348
        %2476 = vmatpush1.bf16.msra.mxu0 %v2347
        %2477 = vmatprep.subr.bf16.mxu0 %v2350
        %2478 = vmatpush1.bf16.msra.mxu0 %v2349
        %2479 = vmatprep.subr.bf16.mxu0 %v2352
        %2480 = vmatpush1.bf16.msra.mxu0 %v2351
        %2481 = vmatprep.subr.bf16.mxu0 %v2354
        %2482 = vmatpush1.bf16.msra.mxu0 %v2353
        %2483 = vmatprep.mubr.bf16.mxu0 %v2048
        %2484 = vmatmul.mubr.bf16.gmra.mrb[0].mxu0 %v2047
        %v2485 = vpop.f32.mrb[0].mxu0
        %v2486 = vadd.f32 %v2124, %v2485
        %v2487 = vpop.f32.mrb[0].mxu0
        %v2488 = vadd.f32 %v2128, %v2487
        %v2489 = vpop.f32.mrb[0].mxu0
        %v2490 = vadd.f32 %v2124, %v2489
        %v2491 = vpop.f32.mrb[0].mxu0
        %v2492 = vadd.f32 %v2128, %v2491
        %2493 = vmatprep.mubr.bf16.mxu0 %v2052
        %2494 = vmatmul.mubr.bf16.gmra.mrb[0].mxu0 %v2051
        %v2495 = vpop.f32.mrb[0].mxu0
        %v2496 = vadd.f32 %v2124, %v2495
        %v2497 = vpop.f32.mrb[0].mxu0
        %v2498 = vadd.f32 %v2128, %v2497
        %v2499 = vpop.f32.mrb[0].mxu0
        %v2500 = vadd.f32 %v2124, %v2499
        %v2501 = vpop.f32.mrb[0].mxu0
        %v2502 = vadd.f32 %v2128, %v2501
        %2503 = vdwg.mxu0
        %2504 = vmatprep.subr.bf16.mxu0 %v2356
        %2505 = vmatpush1.bf16.msra.mxu0 %v2355
        %2506 = vmatprep.subr.bf16.mxu0 %v2358
        %2507 = vmatpush1.bf16.msra.mxu0 %v2357
        %2508 = vmatprep.subr.bf16.mxu0 %v2360
        %2509 = vmatpush1.bf16.msra.mxu0 %v2359
        %2510 = vmatprep.subr.bf16.mxu0 %v2362
        %2511 = vmatpush1.bf16.msra.mxu0 %v2361
        %2512 = vmatprep.subr.bf16.mxu0 %v2364
        %2513 = vmatpush1.bf16.msra.mxu0 %v2363
        %2514 = vmatprep.subr.bf16.mxu0 %v2366
        %2515 = vmatpush1.bf16.msra.mxu0 %v2365
        %2516 = vmatprep.subr.bf16.mxu0 %v2368
        %2517 = vmatpush1.bf16.msra.mxu0 %v2367
        %2518 = vmatprep.subr.bf16.mxu0 %v2370
        %2519 = vmatpush1.bf16.msra.mxu0 %v2369
        %2520 = vmatprep.subr.bf16.mxu0 %v2372
        %2521 = vmatpush1.bf16.msra.mxu0 %v2371
        %2522 = vmatprep.subr.bf16.mxu0 %v2374
        %2523 = vmatpush1.bf16.msra.mxu0 %v2373
        %2524 = vmatprep.subr.bf16.mxu0 %v2376
        %2525 = vmatpush1.bf16.msra.mxu0 %v2375
        %2526 = vmatprep.subr.bf16.mxu0 %v2378
        %2527 = vmatpush1.bf16.msra.mxu0 %v2377
        %2528 = vmatprep.subr.bf16.mxu0 %v2380
        %2529 = vmatpush1.bf16.msra.mxu0 %v2379
        %2530 = vmatprep.subr.bf16.mxu0 %v2382
        %2531 = vmatpush1.bf16.msra.mxu0 %v2381
        %2532 = vmatprep.subr.bf16.mxu0 %v2384
        %2533 = vmatpush1.bf16.msra.mxu0 %v2383
        %2534 = vmatprep.subr.bf16.mxu0 %v2386
        %2535 = vmatpush1.bf16.msra.mxu0 %v2385
        %2536 = vmatprep.mubr.bf16.mxu0 %v2050
        %2537 = vmatmul.mubr.bf16.gmra.mrb[0].mxu0 %v2049
        %v2538 = vpop.f32.mrb[0].mxu0
        %v2539 = vadd.f32 %v2486, %v2538
        %v2540 = vpop.f32.mrb[0].mxu0
        %v2541 = vadd.f32 %v2488, %v2540
        %v2542 = vpop.f32.mrb[0].mxu0
        %v2543 = vadd.f32 %v2490, %v2542
        %v2544 = vpop.f32.mrb[0].mxu0
        %v2545 = vadd.f32 %v2492, %v2544
        %2546 = vmatprep.mubr.bf16.mxu0 %v2054
        %2547 = vmatmul.mubr.bf16.gmra.mrb[0].mxu0 %v2053
        %v2548 = vpop.f32.mrb[0].mxu0
        %v2549 = vadd.f32 %v2496, %v2548
        %v2550 = vpop.f32.mrb[0].mxu0
        %v2551 = vadd.f32 %v2498, %v2550
        %v2552 = vpop.f32.mrb[0].mxu0
        %v2553 = vadd.f32 %v2500, %v2552
        %v2554 = vpop.f32.mrb[0].mxu0
        %v2555 = vadd.f32 %v2502, %v2554
        %2556 = vdwg.mxu0
        %v2557 = vmul.f32 %v2539, 0.2
        %v2558 = vmul.f32 %v2541, 0.2
        %v2559 = vmul.f32 %v2543, 0.2
        %v2560 = vmul.f32 %v2545, 0.2
        %v2561 = vmul.f32 %v2549, 0.2
        %v2562 = vmul.f32 %v2551, 0.2
        %v2563 = vmul.f32 %v2553, 0.2
        %v2564 = vmul.f32 %v2555, 0.2
        %v2565 = vmax.f32 %v2539, %v2557
        %v2566 = vmax.f32 %v2541, %v2558
        %v2567 = vmax.f32 %v2543, %v2559
        %v2568 = vmax.f32 %v2545, %v2560
        %v2569 = vmax.f32 %v2549, %v2561
        %v2570 = vmax.f32 %v2551, %v2562
        %v2571 = vmax.f32 %v2553, %v2563
        %v2572 = vmax.f32 %v2555, %v2564
        %v2573 = vld [vmem:[%s5] sm:$0x3]
        %v2575 = vlaneseq
        %v2576 = vshrl.u32 %v2575, 7
        %v2577 = vsub.s32 0, %v2576
        %v2578 = vrot.slane %v2573, %v2577
        %v2579 = vlaneseq
        %v2580 = vshrl.u32 %v2579, 7
        %v2581 = vsub.s32 1, %v2580
        %v2582 = vrot.slane %v2573, %v2581
        %v2585 = vmul.f32 %v2565, %v2578
        %v2586 = vmul.f32 %v2566, %v2582
        %v2587 = vmul.f32 %v2567, %v2578
        %v2588 = vmul.f32 %v2568, %v2582
        %v2589 = vmul.f32 %v2569, %v2578
        %v2590 = vmul.f32 %v2570, %v2582
        %v2591 = vmul.f32 %v2571, %v2578
        %v2592 = vmul.f32 %v2572, %v2582
        %v2593 = vadd.f32 %v2585, %v2586
        %2594 = vadd.xlane.f32.xlu0 %v2593
        %v2595 = vpop.xlane.xlu0 %2594
        %v2596 = vadd.f32 %v2587, %v2588
        %2597 = vadd.xlane.f32.xlu0 %v2596
        %v2598 = vpop.xlane.xlu0 %2597
        %v2599 = vadd.f32 %v2589, %v2590
        %2600 = vadd.xlane.f32.xlu0 %v2599
        %v2601 = vpop.xlane.xlu0 %2600
        %v2602 = vadd.f32 %v2591, %v2592
        %2603 = vadd.xlane.f32.xlu0 %v2602
        %v2604 = vpop.xlane.xlu0 %2603
        %v2605 = vld [vmem:[#allocation2] sm:$0x1]
        %v2607 = vlaneseq
        %v2608 = vshrl.u32 %v2607, 7
        %v2609 = vsub.s32 0, %v2608
        %v2610 = vrot.slane %v2605, %v2609
        %v2612 = vadd.f32 %v2595, %v2610
        %v2613 = vadd.f32 %v2598, %v2610
        %v2614 = vadd.f32 %v2601, %v2610
        %v2615 = vadd.f32 %v2604, %v2610
        %v2616 = vsub.f32 0.0, %v2612
        %v2617 = vsub.f32 0.0, %v2613
        %v2618 = vsub.f32 0.0, %v2614
        %v2619 = vsub.f32 0.0, %v2615
        %v2620 = vmul.f32 %v2616, 1.442695
        %v2621 = vpow.pop %v2620
        %v2622 = vmul.f32 %v2617, 1.442695
        %v2623 = vpow.pop %v2622
        %v2624 = vmul.f32 %v2618, 1.442695
        %v2625 = vpow.pop %v2624
        %v2626 = vmul.f32 %v2619, 1.442695
        %v2627 = vpow.pop %v2626
        %v2628 = vadd.f32 %v2621, 1.0
        %v2629 = vadd.f32 %v2623, 1.0
        %v2630 = vadd.f32 %v2625, 1.0
        %v2631 = vadd.f32 %v2627, 1.0
        %v2632 = vrcp.pop %v2628
        %v2633 = vrcp.pop %v2629
        %v2634 = vrcp.pop %v2630
        %v2635 = vrcp.pop %v2631
        %vm2636 = vcmask 7168
        %2637 = vst.msk [vmem:[%s331] sm:$0xff] %vm2636, %v2632
        %2638 = vst.msk [vmem:[%s331 + $0x8] sm:$0xff] %vm2636, %v2633
        %2639 = vst.msk [vmem:[%s331 + $0x10] sm:$0xff] %vm2636, %v2634
        %2640 = vst.msk [vmem:[%s331 + $0x18] sm:$0xff] %vm2636, %v2635
        %s2641 = sand.u32 %s184, 1
        %s2642 = sand.u32 %s184, 1
        %s2643 = smul.addr %s2642, 32
        %s2644 = scalar_lea.vmem [#allocation8], %s2643
        // Predicated region
        $region61: #{tpu_custom_call.1} parent=47 // pred_check
          %p2645 = pneg %p194
        $region62: #{tpu_custom_call.1} parent=47 // pred_check_branch
          %2647 = sbr.rel (%p2645) target = $region64
        $region63: #{tpu_custom_call.1} parent=47 // pred_region
          %s2648 = smul.u32 4, %s24
          %s2649 = ssub.s32 7, %s2648
          %p2650 = scmp.lt.s32.totalorder %s2649, 4
          %s2651 = scalar_select %p2650, %s2649, 4
          %s2652 = smul.u32 128, %s2651
          %p2653 = scmp.ne.s32.totalorder 0, %s2652
          %s2654 = smul.addr %s2648, 8
          %s2655 = scalar_lea.vmem %s7, %s2654
          // Predicated region
          $region65: #{tpu_custom_call.1} parent=63 // pred_check
            %p2656 = pneg %p2653
          $region66: #{tpu_custom_call.1} parent=63 // pred_check_branch
            %2658 = sbr.rel (%p2656) target = $region68
          $region67: #{tpu_custom_call.1} parent=63 // pred_region
            // Predicated region
            $region69: #{tpu_custom_call.1} parent=67 // pred_check
              _
            $region70: #{tpu_custom_call.1} parent=67 // pred_check_branch
              %2660 = sbr.rel (0) target = $region72
            $region71: #{tpu_custom_call.1} parent=67 // pred_region
              // Predicated region
              $region91: #{tpu_custom_call.1} parent=71 // pred_check
                _
              $region92: #{tpu_custom_call.1} parent=71 // pred_check_branch
                %2715 = sbr.rel (0) target = $region94
              $region93: #{tpu_custom_call.1} parent=71 // pred_region
                %s2716 = sshrl.u32 %s2651, 2
                // While loop
                $region95: #{tpu_custom_call.1} parent=93 // loop_pre_header
                  _
                $region96: #{tpu_custom_call.1} parent=93 // loop_header
                  %s2718 = sphi 0, %s2720
                  %p2719 = scmp.ge.s32.totalorder %s2718, %s2716
                  %s2723 = sphi 0, %s2736
                  %s2724 = sphi %s2644, %s2739
                  %s2725 = sphi %s2655, %s2740
                $region97: #{tpu_custom_call.1} parent=93 // loop_header_branch
                  %2722 = sbr.rel (%p2719) target = $region101
                $region98: #{tpu_custom_call.1} parent=93 // loop_body
                  %v2726 = vld [vmem:[%s2724] sm:$0xff]
                  %2727 = vst [vmem:[%s2725] sm:$0xff] %v2726
                  %v2728 = vld [vmem:[%s2724 + $0x8] sm:$0xff]
                  %2729 = vst [vmem:[%s2725 + $0x8] sm:$0xff] %v2728
                  %v2730 = vld [vmem:[%s2724 + $0x10] sm:$0xff]
                  %2731 = vst [vmem:[%s2725 + $0x10] sm:$0xff] %v2730
                  %v2732 = vld [vmem:[%s2724 + $0x18] sm:$0xff]
                  %2733 = vst [vmem:[%s2725 + $0x18] sm:$0xff] %v2732
                  %s2734 = sadd.s32 1, %s2723
                  %p2735 = scmp.ge.s32.totalorder %s2734, %s2716
                  %s2736 = scalar_select %p2735, 0, %s2734
                  %s2737 = smul.u32 %s2736, 32
                  %s2738 = smul.u32 %s2736, 32
                  %s2739 = scalar_lea.vmem %s2644, %s2737 [#allocation8]
                  %s2740 = scalar_lea.vmem %s2655, %s2738
                $region99: #{tpu_custom_call.1} parent=93 // loop_footer
                  %s2720 = sadd.s32 %s2718, 1
                $region100: #{tpu_custom_call.1} parent=93 // loop_footer_branch
                  %2717 = sbr.rel target = $region96
                $region101: #{tpu_custom_call.1} parent=93 // loop_exit
                  _
                %s2741 = sshrl.u32 %s2651, 2
                %s2742 = sand.u32 %s2651, 3
                %s2743 = smul.u32 %s2741, 4
                %s2744 = smul.u32 8, %s2743
                %s2745 = scalar_lea.vmem %s2644, %s2744 [#allocation8]
                %s2746 = smul.u32 8, %s2743
                %s2747 = scalar_lea.vmem %s2655, %s2746
                // While loop
                $region102: #{tpu_custom_call.1} parent=93 // loop_pre_header
                  _
                $region103: #{tpu_custom_call.1} parent=93 // loop_header
                  %s2749 = sphi 0, %s2751
                  %p2750 = scmp.ge.s32.totalorder %s2749, %s2742
                  %s2754 = sphi 0, %s2761
                  %s2755 = sphi %s2745, %s2764
                  %s2756 = sphi %s2747, %s2765
                $region104: #{tpu_custom_call.1} parent=93 // loop_header_branch
                  %2753 = sbr.rel (%p2750) target = $region108
                $region105: #{tpu_custom_call.1} parent=93 // loop_body
                  %v2757 = vld [vmem:[%s2755] sm:$0xff]
                  %2758 = vst [vmem:[%s2756] sm:$0xff] %v2757
                  %s2759 = sadd.s32 1, %s2754
                  %p2760 = scmp.ge.s32.totalorder %s2759, %s2742
                  %s2761 = scalar_select %p2760, 0, %s2759
                  %s2762 = smul.u32 %s2761, 8
                  %s2763 = smul.u32 %s2761, 8
                  %s2764 = scalar_lea.vmem %s2745, %s2762 [#allocation8]
                  %s2765 = scalar_lea.vmem %s2747, %s2763
                $region106: #{tpu_custom_call.1} parent=93 // loop_footer
                  %s2751 = sadd.s32 %s2749, 1
                $region107: #{tpu_custom_call.1} parent=93 // loop_footer_branch
                  %2748 = sbr.rel target = $region103
                $region108: #{tpu_custom_call.1} parent=93 // loop_exit
                  _
              $region94: #{tpu_custom_call.1} parent=71 // pred_fallthru
                _
              // Predicated region
              $region109: #{tpu_custom_call.1} parent=71 // pred_check
                _
              $region110: #{tpu_custom_call.1} parent=71 // pred_check_branch
                %2767 = sbr.rel target = $region112
              $region111: #{tpu_custom_call.1} parent=71 // pred_region
                _
              $region112: #{tpu_custom_call.1} parent=71 // pred_fallthru
                _
            $region72: #{tpu_custom_call.1} parent=67 // pred_fallthru
              _
            // Predicated region
            $region73: #{tpu_custom_call.1} parent=67 // pred_check
              _
            $region74: #{tpu_custom_call.1} parent=67 // pred_check_branch
              %2662 = sbr.rel target = $region76
            $region75: #{tpu_custom_call.1} parent=67 // pred_region
              %s2664 = sshrl.u32 %s2651, 2
              // While loop
              $region77: #{tpu_custom_call.1} parent=75 // loop_pre_header
                _
              $region78: #{tpu_custom_call.1} parent=75 // loop_header
                %s2666 = sphi 0, %s2668
                %p2667 = scmp.ge.s32.totalorder %s2666, %s2664
                %s2671 = sphi 0, %s2684
                %s2672 = sphi %s2644, %s2687
                %s2673 = sphi %s2655, %s2688
              $region79: #{tpu_custom_call.1} parent=75 // loop_header_branch
                %2670 = sbr.rel (%p2667) target = $region83
              $region80: #{tpu_custom_call.1} parent=75 // loop_body
                %v2674 = vld [vmem:[%s2672] sm:$0xff]
                %2675 = vst [vmem:[%s2673] sm:$0xff] %v2674
                %v2676 = vld [vmem:[%s2672 + $0x8] sm:$0xff]
                %2677 = vst [vmem:[%s2673 + $0x8] sm:$0xff] %v2676
                %v2678 = vld [vmem:[%s2672 + $0x10] sm:$0xff]
                %2679 = vst [vmem:[%s2673 + $0x10] sm:$0xff] %v2678
                %v2680 = vld [vmem:[%s2672 + $0x18] sm:$0xff]
                %2681 = vst [vmem:[%s2673 + $0x18] sm:$0xff] %v2680
                %s2682 = sadd.s32 1, %s2671
                %p2683 = scmp.ge.s32.totalorder %s2682, %s2664
                %s2684 = scalar_select %p2683, 0, %s2682
                %s2685 = smul.u32 %s2684, 32
                %s2686 = smul.u32 %s2684, 32
                %s2687 = scalar_lea.vmem %s2644, %s2685 [#allocation8]
                %s2688 = scalar_lea.vmem %s2655, %s2686
              $region81: #{tpu_custom_call.1} parent=75 // loop_footer
                %s2668 = sadd.s32 %s2666, 1
              $region82: #{tpu_custom_call.1} parent=75 // loop_footer_branch
                %2665 = sbr.rel target = $region78
              $region83: #{tpu_custom_call.1} parent=75 // loop_exit
                _
              %s2689 = sshrl.u32 %s2651, 2
              %s2690 = sand.u32 %s2651, 3
              %s2691 = smul.u32 %s2689, 4
              %s2692 = smul.u32 8, %s2691
              %s2693 = scalar_lea.vmem %s2644, %s2692 [#allocation8]
              %s2694 = smul.u32 8, %s2691
              %s2695 = scalar_lea.vmem %s2655, %s2694
              // While loop
              $region84: #{tpu_custom_call.1} parent=75 // loop_pre_header
                _
              $region85: #{tpu_custom_call.1} parent=75 // loop_header
                %s2697 = sphi 0, %s2699
                %p2698 = scmp.ge.s32.totalorder %s2697, %s2690
                %s2702 = sphi 0, %s2709
                %s2703 = sphi %s2693, %s2712
                %s2704 = sphi %s2695, %s2713
              $region86: #{tpu_custom_call.1} parent=75 // loop_header_branch
                %2701 = sbr.rel (%p2698) target = $region90
              $region87: #{tpu_custom_call.1} parent=75 // loop_body
                %v2705 = vld [vmem:[%s2703] sm:$0xff]
                %2706 = vst [vmem:[%s2704] sm:$0xff] %v2705
                %s2707 = sadd.s32 1, %s2702
                %p2708 = scmp.ge.s32.totalorder %s2707, %s2690
                %s2709 = scalar_select %p2708, 0, %s2707
                %s2710 = smul.u32 %s2709, 8
                %s2711 = smul.u32 %s2709, 8
                %s2712 = scalar_lea.vmem %s2693, %s2710 [#allocation8]
                %s2713 = scalar_lea.vmem %s2695, %s2711
              $region88: #{tpu_custom_call.1} parent=75 // loop_footer
                %s2699 = sadd.s32 %s2697, 1
              $region89: #{tpu_custom_call.1} parent=75 // loop_footer_branch
                %2696 = sbr.rel target = $region85
              $region90: #{tpu_custom_call.1} parent=75 // loop_exit
                _
            $region76: #{tpu_custom_call.1} parent=67 // pred_fallthru
              _
          $region68: #{tpu_custom_call.1} parent=63 // pred_fallthru
            _
          %2768 = vnop
        $region64: #{tpu_custom_call.1} parent=47 // pred_fallthru
          _
      $region48: #{tpu_custom_call.1} parent=5 // pred_fallthru
        _
      %p2769 = scmp.le.s32.totalorder 2, %s19
      // Predicated region
      $region113: #{tpu_custom_call.1} parent=5 // pred_check
        %p2770 = pneg %p2769
      $region114: #{tpu_custom_call.1} parent=5 // pred_check_branch
        %2772 = sbr.rel (%p2770) target = $region116
      $region115: #{tpu_custom_call.1} parent=5 // pred_region
        %s2773 = ssub.s32 %s19, 2
        // Predicated region
        $region117: #{tpu_custom_call.1} parent=115 // pred_check
          %p2774 = pneg %p200
        $region118: #{tpu_custom_call.1} parent=115 // pred_check_branch
          %2776 = sbr.rel (%p2774) target = $region120
        $region119: #{tpu_custom_call.1} parent=115 // pred_region
          %s2777 = sand.u32 %s185, 1
          %s2778 = sand.u32 %s185, 1
          %s2779 = smul.addr %s2778, 32
          %s2780 = scalar_lea.vmem [#allocation8], %s2779
        $region120: #{tpu_custom_call.1} parent=115 // pred_fallthru
          _
      $region116: #{tpu_custom_call.1} parent=5 // pred_fallthru
        _
    $region6: #{tpu_custom_call.1} parent=1 // loop_footer
      %s23 = sadd.s32 1, %s19
    $region7: #{tpu_custom_call.1} parent=1 // loop_footer_branch
      %18 = sbr.rel target = $region3
    $region8: #{tpu_custom_call.1} parent=1 // loop_exit
      _
    %2781 = vsyncpa [#allocation4], 1
    %s2782 = scalar_lea.sflag [#allocation4], 1
    %2783 = vsyncpa %s2782, 1
    %2784 = vsyncpa [#allocation6], 1

</llo_original>
